<compile_context>
chip_gen: v6e
topology: v6e:2x2x1
jax: 0.10.0
libtpu: 0.0.40
codegen_flags: <defaults>
</compile_context>

<pallas_src>
import functools

import jax
import jax.numpy as jnp
from jax.experimental import pallas as pl
from jax.experimental.pallas import tpu as pltpu


def fused_repeat_conv_kernel(x_ref, w_ref, g_ref, bt_ref, out_ref,
                             xpad_ref, patch_ref, yc_ref, conv_ref,
                             sum_ref, sq_ref, *, N, H, W, r, eps):
    """Fused conv3x3(pad=1) + BatchNorm(batch stats) + channel repeat.

    Grid: (N,) — one image per step, sequential (stats accumulate).

    x_ref:    (1, Cin, H*W)        unpadded input image, spatial in lanes
    w_ref:    (Cout, 9*Cin)        tap-major (kh, kw, cin) conv weights
    g_ref:    (Cout, 1)            BN gamma
    bt_ref:   (Cout, 1)            BN beta
    out_ref:  (N, r*Cout, H*W)     full output, single block, flushed at end
    xpad_ref: (Cin, (H+2)*(W+2))   zero-padded image, flattened (scratch)
    patch_ref:(9*Cin, S)           staged im2col patch (scratch)
    yc_ref:   (Cout, H*W)          compact per-image conv result (scratch)
    conv_ref: (N, Cout, H*W)       resident conv slab, never leaves VMEM
    sum_ref / sq_ref: (Cout, 1)    per-channel running sum / sum of squares
    with S = H*(W+2) - 2.
    """
    i = pl.program_id(0)
    Cin = x_ref.shape[1]
    Cout = w_ref.shape[0]
    WP = W + 2
    S = H * WP - 2

    @pl.when(i == 0)
    def _init():
        # Halo lanes stay zero for every image; only the interior is rewritten.
        xpad_ref[...] = jnp.zeros_like(xpad_ref)
        sum_ref[...] = jnp.zeros_like(sum_ref)
        sq_ref[...] = jnp.zeros_like(sq_ref)

    # ---- zero-pad in VMEM: copy H rows of W into the padded interior --------
    for h in range(H):
        off = (h + 1) * WP + 1
        xpad_ref[:, off:off + W] = x_ref[0, :, h * W:(h + 1) * W].astype(
            xpad_ref.dtype)

    # ---- stage the 9 taps: contiguous lane window at kh*WP + kw -------------
    for kh in range(3):
        for kw in range(3):
            t = kh * 3 + kw
            d = kh * WP + kw
            patch_ref[t * Cin:(t + 1) * Cin, :] = xpad_ref[:, d:d + S]

    # ---- single MXU matmul (K = 9*Cin) --------------------------------------
    y = jnp.dot(w_ref[...], patch_ref[...],
                preferred_element_type=jnp.float32)        # (Cout, S)

    # ---- strip the 2 junk columns per row -> compact lane-dense (Cout, H*W) -
    for h in range(H):
        yc_ref[:, h * W:(h + 1) * W] = y[:, h * WP:h * WP + W]
    yc = yc_ref[...]

    # Keep the conv result resident in VMEM; accumulate BN statistics.
    conv_ref[i] = yc
    sum_ref[...] += jnp.sum(yc, axis=1, keepdims=True)
    sq_ref[...] += jnp.sum(yc * yc, axis=1, keepdims=True)

    # ---- last step: finalize BN, apply, repeat channels, emit output --------
    @pl.when(i == N - 1)
    def _finalize():
        cnt = jnp.float32(N * H * W)
        mean = sum_ref[...] / cnt
        var = sq_ref[...] / cnt - mean * mean            # biased batch variance
        inv = jax.lax.rsqrt(var + eps)
        a = g_ref[...] * inv                             # (Cout, 1)
        b = bt_ref[...] - mean * a                       # (Cout, 1)
        for n in range(N):
            z = (conv_ref[n] * a + b).astype(out_ref.dtype)
            for j in range(r):                           # fused channel repeat
                out_ref[n, j * Cout:(j + 1) * Cout, :] = z


def repeat_conv(x_nchw, weight_oihw, gamma, beta, r, eps=1e-5):
    N, Cin, H, W = x_nchw.shape
    Cout = weight_oihw.shape[0]
    HP, WP = H + 2, W + 2
    HW = H * W
    S = H * WP - 2

    # Free reshape (merges the two minor contiguous dims); no pad copy in HBM.
    xf = x_nchw.reshape(N, Cin, HW)

    # (Cout, Cin, 3, 3) -> (Cout, 9*Cin), tap-major (kh, kw, cin) to match the
    # patch staged inside the kernel.  Tiny host-side op.
    w_mat = jnp.transpose(weight_oihw, (0, 2, 3, 1)).reshape(Cout, 9 * Cin)
    w_mat = w_mat.astype(jnp.float32)
    g = gamma.astype(jnp.float32).reshape(Cout, 1)
    b = beta.astype(jnp.float32).reshape(Cout, 1)

    kernel = functools.partial(fused_repeat_conv_kernel,
                               N=N, H=H, W=W, r=r, eps=eps)

    out_flat = pl.pallas_call(
        kernel,
        grid=(N,),
        in_specs=[
            pl.BlockSpec((1, Cin, HW), lambda i: (i, 0, 0)),
            pl.BlockSpec((Cout, 9 * Cin), lambda i: (0, 0)),
            pl.BlockSpec((Cout, 1), lambda i: (0, 0)),
            pl.BlockSpec((Cout, 1), lambda i: (0, 0)),
        ],
        # Whole output is one block; written on the last step, flushed once.
        out_specs=pl.BlockSpec((N, r * Cout, HW), lambda i: (0, 0, 0)),
        out_shape=jax.ShapeDtypeStruct((N, r * Cout, HW), x_nchw.dtype),
        scratch_shapes=[
            pltpu.VMEM((Cin, HP * WP), jnp.float32),    # padded flat image
            pltpu.VMEM((9 * Cin, S), jnp.float32),      # im2col patch
            pltpu.VMEM((Cout, HW), jnp.float32),        # compact per-image conv
            pltpu.VMEM((N, Cout, HW), jnp.float32),     # resident conv slab
            pltpu.VMEM((Cout, 1), jnp.float32),         # sum
            pltpu.VMEM((Cout, 1), jnp.float32),         # sum of squares
        ],
        compiler_params=pltpu.CompilerParams(
            dimension_semantics=("arbitrary",),   # stats accumulate over batch
        ),
    )(xf, w_mat, g, b)

    # Free reshape back to NCHW; repeat/strip already done in-kernel.
    return out_flat.reshape(N, r * Cout, H, W)


def repeat_conv_reference(x, weight, gamma, beta, r, eps=1e-5):
    conv = jax.lax.conv_general_dilated(
        x, weight, window_strides=(1, 1), padding=((1, 1), (1, 1)),
        dimension_numbers=("NCHW", "OIHW", "NCHW"))
    mean = jnp.mean(conv, axis=(0, 2, 3), keepdims=True)
    var = jnp.mean((conv - mean) ** 2, axis=(0, 2, 3), keepdims=True)
    y = (conv - mean) * jax.lax.rsqrt(var + eps)
    y = y * gamma[None, :, None, None] + beta[None, :, None, None]
    return jnp.concatenate([y] * r, axis=1)


if __name__ == "__main__":
    # Module config: Repeat_Conv(in_planes=4, planes=8, r=2) -> Cout = planes/r = 4
    in_planes, planes, r = 4, 8, 2
    cout = planes // r
    N, H, W = 2, 16, 16

    key = jax.random.PRNGKey(0)
    kx, kw, kg, kb = jax.random.split(key, 4)
    x = jax.random.normal(kx, (N, in_planes, H, W), dtype=jnp.float32)
    weight = jax.random.normal(kw, (cout, in_planes, 3, 3), dtype=jnp.float32) * 0.1
    gamma = 1.0 + 0.1 * jax.random.normal(kg, (cout,), dtype=jnp.float32)
    beta = 0.1 * jax.random.normal(kb, (cout,), dtype=jnp.float32)

    out = jax.block_until_ready(repeat_conv(x, weight, gamma, beta, r))
    ref = repeat_conv_reference(x, weight, gamma, beta, r)

    assert out.shape == (N, planes, H, W), out.shape
    max_err = float(jnp.max(jnp.abs(out - ref)))
    assert jnp.allclose(out, ref, atol=1e-3, rtol=1e-3), max_err

    print("KERNEL_OK")
</pallas_src>

<mosaic_0001>
module attributes {stable_mosaic.version = 11 : i64} {
  func.func @fused_repeat_conv_kernel(%arg0: i32, %arg1: memref<1x4x256xf32, #tpu.memory_space<vmem>>, %arg2: memref<4x36xf32, #tpu.memory_space<vmem>>, %arg3: memref<4x1xf32, #tpu.memory_space<vmem>>, %arg4: memref<4x1xf32, #tpu.memory_space<vmem>>, %arg5: memref<2x8x256xf32, #tpu.memory_space<vmem>>, %arg6: memref<4x324xf32, #tpu.memory_space<vmem>>, %arg7: memref<36x286xf32, #tpu.memory_space<vmem>>, %arg8: memref<4x256xf32, #tpu.memory_space<vmem>>, %arg9: memref<2x4x256xf32, #tpu.memory_space<vmem>>, %arg10: memref<4x1xf32, #tpu.memory_space<vmem>>, %arg11: memref<4x1xf32, #tpu.memory_space<vmem>>) attributes {dimension_semantics = [#tpu.dimension_semantics<arbitrary>], iteration_bounds = array<i64: 2>, scalar_prefetch = 0 : i64, scratch_operands = 6 : i64, tpu.core_type = #tpu.core_type<tc>, window_params = [{transform_indices = @transform_0, window_bounds = array<i64: 1, 4, 256>}, {pipeline_mode = #tpu.pipeline_mode<synchronous>, transform_indices = @transform_1, window_bounds = array<i64: 4, 36>}, {pipeline_mode = #tpu.pipeline_mode<synchronous>, transform_indices = @transform_2, window_bounds = array<i64: 4, 1>}, {pipeline_mode = #tpu.pipeline_mode<synchronous>, transform_indices = @transform_3, window_bounds = array<i64: 4, 1>}, {pipeline_mode = #tpu.pipeline_mode<synchronous>, transform_indices = @transform_4, window_bounds = array<i64: 2, 8, 256>}]} {
    %c0_i32 = arith.constant 0 : i32
    %0 = arith.cmpi eq, %arg0, %c0_i32 : i32
    %1 = arith.extui %0 : i1 to i32
    %c0_i32_0 = arith.constant 0 : i32
    %2 = arith.cmpi ne, %1, %c0_i32_0 : i32
    scf.if %2 {
      %cst_125 = arith.constant 0.000000e+00 : f32
      %123 = vector.broadcast %cst_125 : f32 to vector<4x324xf32>
      %c0_126 = arith.constant 0 : index
      %c0_127 = arith.constant 0 : index
      %124 = vector.load %arg6[%c0_126, %c0_127] : memref<4x324xf32, #tpu.memory_space<vmem>>, vector<4x324xf32>
      tpu.vector_store %arg6[%c0_126, %c0_127], %123 {strides = array<i32>} : memref<4x324xf32, #tpu.memory_space<vmem>>, vector<4x324xf32>,
      %cst_128 = arith.constant 0.000000e+00 : f32
      %125 = vector.broadcast %cst_128 : f32 to vector<4x1xf32>
      %c0_129 = arith.constant 0 : index
      %c0_130 = arith.constant 0 : index
      %126 = vector.load %arg10[%c0_129, %c0_130] : memref<4x1xf32, #tpu.memory_space<vmem>>, vector<4x1xf32>
      tpu.vector_store %arg10[%c0_129, %c0_130], %125 {strides = array<i32>} : memref<4x1xf32, #tpu.memory_space<vmem>>, vector<4x1xf32>,
      %cst_131 = arith.constant 0.000000e+00 : f32
      %127 = vector.broadcast %cst_131 : f32 to vector<4x1xf32>
      %c0_132 = arith.constant 0 : index
      %c0_133 = arith.constant 0 : index
      %128 = vector.load %arg11[%c0_132, %c0_133] : memref<4x1xf32, #tpu.memory_space<vmem>>, vector<4x1xf32>
      tpu.vector_store %arg11[%c0_132, %c0_133], %127 {strides = array<i32>} : memref<4x1xf32, #tpu.memory_space<vmem>>, vector<4x1xf32>,
    } else {
    }
    %c0 = arith.constant 0 : index
    %c0_1 = arith.constant 0 : index
    %c0_2 = arith.constant 0 : index
    %3 = vector.load %arg1[%c0, %c0_1, %c0_2] : memref<1x4x256xf32, #tpu.memory_space<vmem>>, vector<1x4x16xf32>
    %4 = vector.shape_cast %3 : vector<1x4x16xf32> to vector<4x16xf32>
    %c0_3 = arith.constant 0 : index
    %c19 = arith.constant 19 : index
    %5 = vector.load %arg6[%c0_3, %c19] : memref<4x324xf32, #tpu.memory_space<vmem>>, vector<4x16xf32>
    tpu.vector_store %arg6[%c0_3, %c19], %4 {strides = array<i32>} : memref<4x324xf32, #tpu.memory_space<vmem>>, vector<4x16xf32>,
    %c0_4 = arith.constant 0 : index
    %c0_5 = arith.constant 0 : index
    %c16 = arith.constant 16 : index
    %6 = vector.load %arg1[%c0_4, %c0_5, %c16] : memref<1x4x256xf32, #tpu.memory_space<vmem>>, vector<1x4x16xf32>
    %7 = vector.shape_cast %6 : vector<1x4x16xf32> to vector<4x16xf32>
    %c0_6 = arith.constant 0 : index
    %c37 = arith.constant 37 : index
    %8 = vector.load %arg6[%c0_6, %c37] : memref<4x324xf32, #tpu.memory_space<vmem>>, vector<4x16xf32>
    tpu.vector_store %arg6[%c0_6, %c37], %7 {strides = array<i32>} : memref<4x324xf32, #tpu.memory_space<vmem>>, vector<4x16xf32>,
    %c0_7 = arith.constant 0 : index
    %c0_8 = arith.constant 0 : index
    %c32 = arith.constant 32 : index
    %9 = vector.load %arg1[%c0_7, %c0_8, %c32] : memref<1x4x256xf32, #tpu.memory_space<vmem>>, vector<1x4x16xf32>
    %10 = vector.shape_cast %9 : vector<1x4x16xf32> to vector<4x16xf32>
    %c0_9 = arith.constant 0 : index
    %c55 = arith.constant 55 : index
    %11 = vector.load %arg6[%c0_9, %c55] : memref<4x324xf32, #tpu.memory_space<vmem>>, vector<4x16xf32>
    tpu.vector_store %arg6[%c0_9, %c55], %10 {strides = array<i32>} : memref<4x324xf32, #tpu.memory_space<vmem>>, vector<4x16xf32>,
    %c0_10 = arith.constant 0 : index
    %c0_11 = arith.constant 0 : index
    %c48 = arith.constant 48 : index
    %12 = vector.load %arg1[%c0_10, %c0_11, %c48] : memref<1x4x256xf32, #tpu.memory_space<vmem>>, vector<1x4x16xf32>
    %13 = vector.shape_cast %12 : vector<1x4x16xf32> to vector<4x16xf32>
    %c0_12 = arith.constant 0 : index
    %c73 = arith.constant 73 : index
    %14 = vector.load %arg6[%c0_12, %c73] : memref<4x324xf32, #tpu.memory_space<vmem>>, vector<4x16xf32>
    tpu.vector_store %arg6[%c0_12, %c73], %13 {strides = array<i32>} : memref<4x324xf32, #tpu.memory_space<vmem>>, vector<4x16xf32>,
    %c0_13 = arith.constant 0 : index
    %c0_14 = arith.constant 0 : index
    %c64 = arith.constant 64 : index
    %15 = vector.load %arg1[%c0_13, %c0_14, %c64] : memref<1x4x256xf32, #tpu.memory_space<vmem>>, vector<1x4x16xf32>
    %16 = vector.shape_cast %15 : vector<1x4x16xf32> to vector<4x16xf32>
    %c0_15 = arith.constant 0 : index
    %c91 = arith.constant 91 : index
    %17 = vector.load %arg6[%c0_15, %c91] : memref<4x324xf32, #tpu.memory_space<vmem>>, vector<4x16xf32>
    tpu.vector_store %arg6[%c0_15, %c91], %16 {strides = array<i32>} : memref<4x324xf32, #tpu.memory_space<vmem>>, vector<4x16xf32>,
    %c0_16 = arith.constant 0 : index
    %c0_17 = arith.constant 0 : index
    %c80 = arith.constant 80 : index
    %18 = vector.load %arg1[%c0_16, %c0_17, %c80] : memref<1x4x256xf32, #tpu.memory_space<vmem>>, vector<1x4x16xf32>
    %19 = vector.shape_cast %18 : vector<1x4x16xf32> to vector<4x16xf32>
    %c0_18 = arith.constant 0 : index
    %c109 = arith.constant 109 : index
    %20 = vector.load %arg6[%c0_18, %c109] : memref<4x324xf32, #tpu.memory_space<vmem>>, vector<4x16xf32>
    tpu.vector_store %arg6[%c0_18, %c109], %19 {strides = array<i32>} : memref<4x324xf32, #tpu.memory_space<vmem>>, vector<4x16xf32>,
    %c0_19 = arith.constant 0 : index
    %c0_20 = arith.constant 0 : index
    %c96 = arith.constant 96 : index
    %21 = vector.load %arg1[%c0_19, %c0_20, %c96] : memref<1x4x256xf32, #tpu.memory_space<vmem>>, vector<1x4x16xf32>
    %22 = vector.shape_cast %21 : vector<1x4x16xf32> to vector<4x16xf32>
    %c0_21 = arith.constant 0 : index
    %c127 = arith.constant 127 : index
    %23 = vector.load %arg6[%c0_21, %c127] : memref<4x324xf32, #tpu.memory_space<vmem>>, vector<4x16xf32>
    tpu.vector_store %arg6[%c0_21, %c127], %22 {strides = array<i32>} : memref<4x324xf32, #tpu.memory_space<vmem>>, vector<4x16xf32>,
    %c0_22 = arith.constant 0 : index
    %c0_23 = arith.constant 0 : index
    %c112 = arith.constant 112 : index
    %24 = vector.load %arg1[%c0_22, %c0_23, %c112] : memref<1x4x256xf32, #tpu.memory_space<vmem>>, vector<1x4x16xf32>
    %25 = vector.shape_cast %24 : vector<1x4x16xf32> to vector<4x16xf32>
    %c0_24 = arith.constant 0 : index
    %c145 = arith.constant 145 : index
    %26 = vector.load %arg6[%c0_24, %c145] : memref<4x324xf32, #tpu.memory_space<vmem>>, vector<4x16xf32>
    tpu.vector_store %arg6[%c0_24, %c145], %25 {strides = array<i32>} : memref<4x324xf32, #tpu.memory_space<vmem>>, vector<4x16xf32>,
    %c0_25 = arith.constant 0 : index
    %c0_26 = arith.constant 0 : index
    %c128 = arith.constant 128 : index
    %27 = vector.load %arg1[%c0_25, %c0_26, %c128] : memref<1x4x256xf32, #tpu.memory_space<vmem>>, vector<1x4x16xf32>
    %28 = vector.shape_cast %27 : vector<1x4x16xf32> to vector<4x16xf32>
    %c0_27 = arith.constant 0 : index
    %c163 = arith.constant 163 : index
    %29 = vector.load %arg6[%c0_27, %c163] : memref<4x324xf32, #tpu.memory_space<vmem>>, vector<4x16xf32>
    tpu.vector_store %arg6[%c0_27, %c163], %28 {strides = array<i32>} : memref<4x324xf32, #tpu.memory_space<vmem>>, vector<4x16xf32>,
    %c0_28 = arith.constant 0 : index
    %c0_29 = arith.constant 0 : index
    %c144 = arith.constant 144 : index
    %30 = vector.load %arg1[%c0_28, %c0_29, %c144] : memref<1x4x256xf32, #tpu.memory_space<vmem>>, vector<1x4x16xf32>
    %31 = vector.shape_cast %30 : vector<1x4x16xf32> to vector<4x16xf32>
    %c0_30 = arith.constant 0 : index
    %c181 = arith.constant 181 : index
    %32 = vector.load %arg6[%c0_30, %c181] : memref<4x324xf32, #tpu.memory_space<vmem>>, vector<4x16xf32>
    tpu.vector_store %arg6[%c0_30, %c181], %31 {strides = array<i32>} : memref<4x324xf32, #tpu.memory_space<vmem>>, vector<4x16xf32>,
    %c0_31 = arith.constant 0 : index
    %c0_32 = arith.constant 0 : index
    %c160 = arith.constant 160 : index
    %33 = vector.load %arg1[%c0_31, %c0_32, %c160] : memref<1x4x256xf32, #tpu.memory_space<vmem>>, vector<1x4x16xf32>
    %34 = vector.shape_cast %33 : vector<1x4x16xf32> to vector<4x16xf32>
    %c0_33 = arith.constant 0 : index
    %c199 = arith.constant 199 : index
    %35 = vector.load %arg6[%c0_33, %c199] : memref<4x324xf32, #tpu.memory_space<vmem>>, vector<4x16xf32>
    tpu.vector_store %arg6[%c0_33, %c199], %34 {strides = array<i32>} : memref<4x324xf32, #tpu.memory_space<vmem>>, vector<4x16xf32>,
    %c0_34 = arith.constant 0 : index
    %c0_35 = arith.constant 0 : index
    %c176 = arith.constant 176 : index
    %36 = vector.load %arg1[%c0_34, %c0_35, %c176] : memref<1x4x256xf32, #tpu.memory_space<vmem>>, vector<1x4x16xf32>
    %37 = vector.shape_cast %36 : vector<1x4x16xf32> to vector<4x16xf32>
    %c0_36 = arith.constant 0 : index
    %c217 = arith.constant 217 : index
    %38 = vector.load %arg6[%c0_36, %c217] : memref<4x324xf32, #tpu.memory_space<vmem>>, vector<4x16xf32>
    tpu.vector_store %arg6[%c0_36, %c217], %37 {strides = array<i32>} : memref<4x324xf32, #tpu.memory_space<vmem>>, vector<4x16xf32>,
    %c0_37 = arith.constant 0 : index
    %c0_38 = arith.constant 0 : index
    %c192 = arith.constant 192 : index
    %39 = vector.load %arg1[%c0_37, %c0_38, %c192] : memref<1x4x256xf32, #tpu.memory_space<vmem>>, vector<1x4x16xf32>
    %40 = vector.shape_cast %39 : vector<1x4x16xf32> to vector<4x16xf32>
    %c0_39 = arith.constant 0 : index
    %c235 = arith.constant 235 : index
    %41 = vector.load %arg6[%c0_39, %c235] : memref<4x324xf32, #tpu.memory_space<vmem>>, vector<4x16xf32>
    tpu.vector_store %arg6[%c0_39, %c235], %40 {strides = array<i32>} : memref<4x324xf32, #tpu.memory_space<vmem>>, vector<4x16xf32>,
    %c0_40 = arith.constant 0 : index
    %c0_41 = arith.constant 0 : index
    %c208 = arith.constant 208 : index
    %42 = vector.load %arg1[%c0_40, %c0_41, %c208] : memref<1x4x256xf32, #tpu.memory_space<vmem>>, vector<1x4x16xf32>
    %43 = vector.shape_cast %42 : vector<1x4x16xf32> to vector<4x16xf32>
    %c0_42 = arith.constant 0 : index
    %c253 = arith.constant 253 : index
    %44 = vector.load %arg6[%c0_42, %c253] : memref<4x324xf32, #tpu.memory_space<vmem>>, vector<4x16xf32>
    tpu.vector_store %arg6[%c0_42, %c253], %43 {strides = array<i32>} : memref<4x324xf32, #tpu.memory_space<vmem>>, vector<4x16xf32>,
    %c0_43 = arith.constant 0 : index
    %c0_44 = arith.constant 0 : index
    %c224 = arith.constant 224 : index
    %45 = vector.load %arg1[%c0_43, %c0_44, %c224] : memref<1x4x256xf32, #tpu.memory_space<vmem>>, vector<1x4x16xf32>
    %46 = vector.shape_cast %45 : vector<1x4x16xf32> to vector<4x16xf32>
    %c0_45 = arith.constant 0 : index
    %c271 = arith.constant 271 : index
    %47 = vector.load %arg6[%c0_45, %c271] : memref<4x324xf32, #tpu.memory_space<vmem>>, vector<4x16xf32>
    tpu.vector_store %arg6[%c0_45, %c271], %46 {strides = array<i32>} : memref<4x324xf32, #tpu.memory_space<vmem>>, vector<4x16xf32>,
    %c0_46 = arith.constant 0 : index
    %c0_47 = arith.constant 0 : index
    %c240 = arith.constant 240 : index
    %48 = vector.load %arg1[%c0_46, %c0_47, %c240] : memref<1x4x256xf32, #tpu.memory_space<vmem>>, vector<1x4x16xf32>
    %49 = vector.shape_cast %48 : vector<1x4x16xf32> to vector<4x16xf32>
    %c0_48 = arith.constant 0 : index
    %c289 = arith.constant 289 : index
    %50 = vector.load %arg6[%c0_48, %c289] : memref<4x324xf32, #tpu.memory_space<vmem>>, vector<4x16xf32>
    tpu.vector_store %arg6[%c0_48, %c289], %49 {strides = array<i32>} : memref<4x324xf32, #tpu.memory_space<vmem>>, vector<4x16xf32>,
    %c0_49 = arith.constant 0 : index
    %c0_50 = arith.constant 0 : index
    %51 = vector.load %arg6[%c0_49, %c0_50] : memref<4x324xf32, #tpu.memory_space<vmem>>, vector<4x286xf32>
    %c0_51 = arith.constant 0 : index
    %c0_52 = arith.constant 0 : index
    %52 = vector.load %arg7[%c0_51, %c0_52] : memref<36x286xf32, #tpu.memory_space<vmem>>, vector<4x286xf32>
    tpu.vector_store %arg7[%c0_51, %c0_52], %51 {strides = array<i32>} : memref<36x286xf32, #tpu.memory_space<vmem>>, vector<4x286xf32>,
    %c0_53 = arith.constant 0 : index
    %c1 = arith.constant 1 : index
    %53 = vector.load %arg6[%c0_53, %c1] : memref<4x324xf32, #tpu.memory_space<vmem>>, vector<4x286xf32>
    %c4 = arith.constant 4 : index
    %c0_54 = arith.constant 0 : index
    %54 = vector.load %arg7[%c4, %c0_54] : memref<36x286xf32, #tpu.memory_space<vmem>>, vector<4x286xf32>
    tpu.vector_store %arg7[%c4, %c0_54], %53 {strides = array<i32>} : memref<36x286xf32, #tpu.memory_space<vmem>>, vector<4x286xf32>,
    %c0_55 = arith.constant 0 : index
    %c2 = arith.constant 2 : index
    %55 = vector.load %arg6[%c0_55, %c2] : memref<4x324xf32, #tpu.memory_space<vmem>>, vector<4x286xf32>
    %c8 = arith.constant 8 : index
    %c0_56 = arith.constant 0 : index
    %56 = vector.load %arg7[%c8, %c0_56] : memref<36x286xf32, #tpu.memory_space<vmem>>, vector<4x286xf32>
    tpu.vector_store %arg7[%c8, %c0_56], %55 {strides = array<i32>} : memref<36x286xf32, #tpu.memory_space<vmem>>, vector<4x286xf32>,
    %c0_57 = arith.constant 0 : index
    %c18 = arith.constant 18 : index
    %57 = vector.load %arg6[%c0_57, %c18] : memref<4x324xf32, #tpu.memory_space<vmem>>, vector<4x286xf32>
    %c12 = arith.constant 12 : index
    %c0_58 = arith.constant 0 : index
    %58 = vector.load %arg7[%c12, %c0_58] : memref<36x286xf32, #tpu.memory_space<vmem>>, vector<4x286xf32>
    tpu.vector_store %arg7[%c12, %c0_58], %57 {strides = array<i32>} : memref<36x286xf32, #tpu.memory_space<vmem>>, vector<4x286xf32>,
    %c0_59 = arith.constant 0 : index
    %c19_60 = arith.constant 19 : index
    %59 = vector.load %arg6[%c0_59, %c19_60] : memref<4x324xf32, #tpu.memory_space<vmem>>, vector<4x286xf32>
    %c16_61 = arith.constant 16 : index
    %c0_62 = arith.constant 0 : index
    %60 = vector.load %arg7[%c16_61, %c0_62] : memref<36x286xf32, #tpu.memory_space<vmem>>, vector<4x286xf32>
    tpu.vector_store %arg7[%c16_61, %c0_62], %59 {strides = array<i32>} : memref<36x286xf32, #tpu.memory_space<vmem>>, vector<4x286xf32>,
    %c0_63 = arith.constant 0 : index
    %c20 = arith.constant 20 : index
    %61 = vector.load %arg6[%c0_63, %c20] : memref<4x324xf32, #tpu.memory_space<vmem>>, vector<4x286xf32>
    %c20_64 = arith.constant 20 : index
    %c0_65 = arith.constant 0 : index
    %62 = vector.load %arg7[%c20_64, %c0_65] : memref<36x286xf32, #tpu.memory_space<vmem>>, vector<4x286xf32>
    tpu.vector_store %arg7[%c20_64, %c0_65], %61 {strides = array<i32>} : memref<36x286xf32, #tpu.memory_space<vmem>>, vector<4x286xf32>,
    %c0_66 = arith.constant 0 : index
    %c36 = arith.constant 36 : index
    %63 = vector.load %arg6[%c0_66, %c36] : memref<4x324xf32, #tpu.memory_space<vmem>>, vector<4x286xf32>
    %c24 = arith.constant 24 : index
    %c0_67 = arith.constant 0 : index
    %64 = vector.load %arg7[%c24, %c0_67] : memref<36x286xf32, #tpu.memory_space<vmem>>, vector<4x286xf32>
    tpu.vector_store %arg7[%c24, %c0_67], %63 {strides = array<i32>} : memref<36x286xf32, #tpu.memory_space<vmem>>, vector<4x286xf32>,
    %c0_68 = arith.constant 0 : index
    %c37_69 = arith.constant 37 : index
    %65 = vector.load %arg6[%c0_68, %c37_69] : memref<4x324xf32, #tpu.memory_space<vmem>>, vector<4x286xf32>
    %c28 = arith.constant 28 : index
    %c0_70 = arith.constant 0 : index
    %66 = vector.load %arg7[%c28, %c0_70] : memref<36x286xf32, #tpu.memory_space<vmem>>, vector<4x286xf32>
    tpu.vector_store %arg7[%c28, %c0_70], %65 {strides = array<i32>} : memref<36x286xf32, #tpu.memory_space<vmem>>, vector<4x286xf32>,
    %c0_71 = arith.constant 0 : index
    %c38 = arith.constant 38 : index
    %67 = vector.load %arg6[%c0_71, %c38] : memref<4x324xf32, #tpu.memory_space<vmem>>, vector<4x286xf32>
    %c32_72 = arith.constant 32 : index
    %c0_73 = arith.constant 0 : index
    %68 = vector.load %arg7[%c32_72, %c0_73] : memref<36x286xf32, #tpu.memory_space<vmem>>, vector<4x286xf32>
    tpu.vector_store %arg7[%c32_72, %c0_73], %67 {strides = array<i32>} : memref<36x286xf32, #tpu.memory_space<vmem>>, vector<4x286xf32>,
    %c0_74 = arith.constant 0 : index
    %c0_75 = arith.constant 0 : index
    %69 = vector.load %arg2[%c0_74, %c0_75] : memref<4x36xf32, #tpu.memory_space<vmem>>, vector<4x36xf32>
    %c0_76 = arith.constant 0 : index
    %c0_77 = arith.constant 0 : index
    %70 = vector.load %arg7[%c0_76, %c0_77] : memref<36x286xf32, #tpu.memory_space<vmem>>, vector<36x286xf32>
    %cst = arith.constant dense<0.000000e+00> : vector<4x286xf32>
    %71 = tpu.matmul %69, %70, %cst {dimension_numbers = #tpu.dot_dimension_numbers<[1], [0], [0], [1], [0, 0, 1, 1], [], []>} : vector<4x36xf32>, vector<36x286xf32>, vector<4x286xf32> -> vector<4x286xf32>
    %72 = vector.extract_strided_slice %71 {offsets = [0, 0], sizes = [4, 16], strides = [1, 1]} : vector<4x286xf32> to vector<4x16xf32>
    %c0_78 = arith.constant 0 : index
    %c0_79 = arith.constant 0 : index
    %73 = vector.load %arg8[%c0_78, %c0_79] : memref<4x256xf32, #tpu.memory_space<vmem>>, vector<4x16xf32>
    tpu.vector_store %arg8[%c0_78, %c0_79], %72 {strides = array<i32>} : memref<4x256xf32, #tpu.memory_space<vmem>>, vector<4x16xf32>,
    %74 = vector.extract_strided_slice %71 {offsets = [0, 18], sizes = [4, 16], strides = [1, 1]} : vector<4x286xf32> to vector<4x16xf32>
    %c0_80 = arith.constant 0 : index
    %c16_81 = arith.constant 16 : index
    %75 = vector.load %arg8[%c0_80, %c16_81] : memref<4x256xf32, #tpu.memory_space<vmem>>, vector<4x16xf32>
    tpu.vector_store %arg8[%c0_80, %c16_81], %74 {strides = array<i32>} : memref<4x256xf32, #tpu.memory_space<vmem>>, vector<4x16xf32>,
    %76 = vector.extract_strided_slice %71 {offsets = [0, 36], sizes = [4, 16], strides = [1, 1]} : vector<4x286xf32> to vector<4x16xf32>
    %c0_82 = arith.constant 0 : index
    %c32_83 = arith.constant 32 : index
    %77 = vector.load %arg8[%c0_82, %c32_83] : memref<4x256xf32, #tpu.memory_space<vmem>>, vector<4x16xf32>
    tpu.vector_store %arg8[%c0_82, %c32_83], %76 {strides = array<i32>} : memref<4x256xf32, #tpu.memory_space<vmem>>, vector<4x16xf32>,
    %78 = vector.extract_strided_slice %71 {offsets = [0, 54], sizes = [4, 16], strides = [1, 1]} : vector<4x286xf32> to vector<4x16xf32>
    %c0_84 = arith.constant 0 : index
    %c48_85 = arith.constant 48 : index
    %79 = vector.load %arg8[%c0_84, %c48_85] : memref<4x256xf32, #tpu.memory_space<vmem>>, vector<4x16xf32>
    tpu.vector_store %arg8[%c0_84, %c48_85], %78 {strides = array<i32>} : memref<4x256xf32, #tpu.memory_space<vmem>>, vector<4x16xf32>,
    %80 = vector.extract_strided_slice %71 {offsets = [0, 72], sizes = [4, 16], strides = [1, 1]} : vector<4x286xf32> to vector<4x16xf32>
    %c0_86 = arith.constant 0 : index
    %c64_87 = arith.constant 64 : index
    %81 = vector.load %arg8[%c0_86, %c64_87] : memref<4x256xf32, #tpu.memory_space<vmem>>, vector<4x16xf32>
    tpu.vector_store %arg8[%c0_86, %c64_87], %80 {strides = array<i32>} : memref<4x256xf32, #tpu.memory_space<vmem>>, vector<4x16xf32>,
    %82 = vector.extract_strided_slice %71 {offsets = [0, 90], sizes = [4, 16], strides = [1, 1]} : vector<4x286xf32> to vector<4x16xf32>
    %c0_88 = arith.constant 0 : index
    %c80_89 = arith.constant 80 : index
    %83 = vector.load %arg8[%c0_88, %c80_89] : memref<4x256xf32, #tpu.memory_space<vmem>>, vector<4x16xf32>
    tpu.vector_store %arg8[%c0_88, %c80_89], %82 {strides = array<i32>} : memref<4x256xf32, #tpu.memory_space<vmem>>, vector<4x16xf32>,
    %84 = vector.extract_strided_slice %71 {offsets = [0, 108], sizes = [4, 16], strides = [1, 1]} : vector<4x286xf32> to vector<4x16xf32>
    %c0_90 = arith.constant 0 : index
    %c96_91 = arith.constant 96 : index
    %85 = vector.load %arg8[%c0_90, %c96_91] : memref<4x256xf32, #tpu.memory_space<vmem>>, vector<4x16xf32>
    tpu.vector_store %arg8[%c0_90, %c96_91], %84 {strides = array<i32>} : memref<4x256xf32, #tpu.memory_space<vmem>>, vector<4x16xf32>,
    %86 = vector.extract_strided_slice %71 {offsets = [0, 126], sizes = [4, 16], strides = [1, 1]} : vector<4x286xf32> to vector<4x16xf32>
    %c0_92 = arith.constant 0 : index
    %c112_93 = arith.constant 112 : index
    %87 = vector.load %arg8[%c0_92, %c112_93] : memref<4x256xf32, #tpu.memory_space<vmem>>, vector<4x16xf32>
    tpu.vector_store %arg8[%c0_92, %c112_93], %86 {strides = array<i32>} : memref<4x256xf32, #tpu.memory_space<vmem>>, vector<4x16xf32>,
    %88 = vector.extract_strided_slice %71 {offsets = [0, 144], sizes = [4, 16], strides = [1, 1]} : vector<4x286xf32> to vector<4x16xf32>
    %c0_94 = arith.constant 0 : index
    %c128_95 = arith.constant 128 : index
    %89 = vector.load %arg8[%c0_94, %c128_95] : memref<4x256xf32, #tpu.memory_space<vmem>>, vector<4x16xf32>
    tpu.vector_store %arg8[%c0_94, %c128_95], %88 {strides = array<i32>} : memref<4x256xf32, #tpu.memory_space<vmem>>, vector<4x16xf32>,
    %90 = vector.extract_strided_slice %71 {offsets = [0, 162], sizes = [4, 16], strides = [1, 1]} : vector<4x286xf32> to vector<4x16xf32>
    %c0_96 = arith.constant 0 : index
    %c144_97 = arith.constant 144 : index
    %91 = vector.load %arg8[%c0_96, %c144_97] : memref<4x256xf32, #tpu.memory_space<vmem>>, vector<4x16xf32>
    tpu.vector_store %arg8[%c0_96, %c144_97], %90 {strides = array<i32>} : memref<4x256xf32, #tpu.memory_space<vmem>>, vector<4x16xf32>,
    %92 = vector.extract_strided_slice %71 {offsets = [0, 180], sizes = [4, 16], strides = [1, 1]} : vector<4x286xf32> to vector<4x16xf32>
    %c0_98 = arith.constant 0 : index
    %c160_99 = arith.constant 160 : index
    %93 = vector.load %arg8[%c0_98, %c160_99] : memref<4x256xf32, #tpu.memory_space<vmem>>, vector<4x16xf32>
    tpu.vector_store %arg8[%c0_98, %c160_99], %92 {strides = array<i32>} : memref<4x256xf32, #tpu.memory_space<vmem>>, vector<4x16xf32>,
    %94 = vector.extract_strided_slice %71 {offsets = [0, 198], sizes = [4, 16], strides = [1, 1]} : vector<4x286xf32> to vector<4x16xf32>
    %c0_100 = arith.constant 0 : index
    %c176_101 = arith.constant 176 : index
    %95 = vector.load %arg8[%c0_100, %c176_101] : memref<4x256xf32, #tpu.memory_space<vmem>>, vector<4x16xf32>
    tpu.vector_store %arg8[%c0_100, %c176_101], %94 {strides = array<i32>} : memref<4x256xf32, #tpu.memory_space<vmem>>, vector<4x16xf32>,
    %96 = vector.extract_strided_slice %71 {offsets = [0, 216], sizes = [4, 16], strides = [1, 1]} : vector<4x286xf32> to vector<4x16xf32>
    %c0_102 = arith.constant 0 : index
    %c192_103 = arith.constant 192 : index
    %97 = vector.load %arg8[%c0_102, %c192_103] : memref<4x256xf32, #tpu.memory_space<vmem>>, vector<4x16xf32>
    tpu.vector_store %arg8[%c0_102, %c192_103], %96 {strides = array<i32>} : memref<4x256xf32, #tpu.memory_space<vmem>>, vector<4x16xf32>,
    %98 = vector.extract_strided_slice %71 {offsets = [0, 234], sizes = [4, 16], strides = [1, 1]} : vector<4x286xf32> to vector<4x16xf32>
    %c0_104 = arith.constant 0 : index
    %c208_105 = arith.constant 208 : index
    %99 = vector.load %arg8[%c0_104, %c208_105] : memref<4x256xf32, #tpu.memory_space<vmem>>, vector<4x16xf32>
    tpu.vector_store %arg8[%c0_104, %c208_105], %98 {strides = array<i32>} : memref<4x256xf32, #tpu.memory_space<vmem>>, vector<4x16xf32>,
    %100 = vector.extract_strided_slice %71 {offsets = [0, 252], sizes = [4, 16], strides = [1, 1]} : vector<4x286xf32> to vector<4x16xf32>
    %c0_106 = arith.constant 0 : index
    %c224_107 = arith.constant 224 : index
    %101 = vector.load %arg8[%c0_106, %c224_107] : memref<4x256xf32, #tpu.memory_space<vmem>>, vector<4x16xf32>
    tpu.vector_store %arg8[%c0_106, %c224_107], %100 {strides = array<i32>} : memref<4x256xf32, #tpu.memory_space<vmem>>, vector<4x16xf32>,
    %102 = vector.extract_strided_slice %71 {offsets = [0, 270], sizes = [4, 16], strides = [1, 1]} : vector<4x286xf32> to vector<4x16xf32>
    %c0_108 = arith.constant 0 : index
    %c240_109 = arith.constant 240 : index
    %103 = vector.load %arg8[%c0_108, %c240_109] : memref<4x256xf32, #tpu.memory_space<vmem>>, vector<4x16xf32>
    tpu.vector_store %arg8[%c0_108, %c240_109], %102 {strides = array<i32>} : memref<4x256xf32, #tpu.memory_space<vmem>>, vector<4x16xf32>,
    %c0_110 = arith.constant 0 : index
    %c0_111 = arith.constant 0 : index
    %104 = vector.load %arg8[%c0_110, %c0_111] : memref<4x256xf32, #tpu.memory_space<vmem>>, vector<4x256xf32>
    %105 = arith.index_cast %arg0 : i32 to index
    %c0_112 = arith.constant 0 : index
    %c0_113 = arith.constant 0 : index
    %106 = vector.load %arg9[%105, %c0_112, %c0_113] : memref<2x4x256xf32, #tpu.memory_space<vmem>>, vector<1x4x256xf32>
    %107 = vector.shape_cast %106 : vector<1x4x256xf32> to vector<4x256xf32>
    %108 = vector.shape_cast %104 : vector<4x256xf32> to vector<1x4x256xf32>
    tpu.vector_store %arg9[%105, %c0_112, %c0_113], %108 {strides = array<i32>} : memref<2x4x256xf32, #tpu.memory_space<vmem>>, vector<1x4x256xf32>,
    %c0_114 = arith.constant 0 : index
    %c0_115 = arith.constant 0 : index
    %109 = vector.load %arg10[%c0_114, %c0_115] : memref<4x1xf32, #tpu.memory_space<vmem>>, vector<4x1xf32>
    %cst_116 = arith.constant dense<0.000000e+00> : vector<4xf32>
    %110 = vector.multi_reduction <add>, %104, %cst_116 [1] : vector<4x256xf32> to vector<4xf32>
    %111 = vector.shape_cast %110 : vector<4xf32> to vector<4x1xf32>
    %112 = arith.addf %109, %111 : vector<4x1xf32>
    %c0_117 = arith.constant 0 : index
    %c0_118 = arith.constant 0 : index
    %113 = vector.load %arg10[%c0_117, %c0_118] : memref<4x1xf32, #tpu.memory_space<vmem>>, vector<4x1xf32>
    tpu.vector_store %arg10[%c0_117, %c0_118], %112 {strides = array<i32>} : memref<4x1xf32, #tpu.memory_space<vmem>>, vector<4x1xf32>,
    %c0_119 = arith.constant 0 : index
    %c0_120 = arith.constant 0 : index
    %114 = vector.load %arg11[%c0_119, %c0_120] : memref<4x1xf32, #tpu.memory_space<vmem>>, vector<4x1xf32>
    %115 = arith.mulf %104, %104 : vector<4x256xf32>
    %cst_121 = arith.constant dense<0.000000e+00> : vector<4xf32>
    %116 = vector.multi_reduction <add>, %115, %cst_121 [1] : vector<4x256xf32> to vector<4xf32>
    %117 = vector.shape_cast %116 : vector<4xf32> to vector<4x1xf32>
    %118 = arith.addf %114, %117 : vector<4x1xf32>
    %c0_122 = arith.constant 0 : index
    %c0_123 = arith.constant 0 : index
    %119 = vector.load %arg11[%c0_122, %c0_123] : memref<4x1xf32, #tpu.memory_space<vmem>>, vector<4x1xf32>
    tpu.vector_store %arg11[%c0_122, %c0_123], %118 {strides = array<i32>} : memref<4x1xf32, #tpu.memory_space<vmem>>, vector<4x1xf32>,
    %c1_i32 = arith.constant 1 : i32
    %120 = arith.cmpi eq, %arg0, %c1_i32 : i32
    %121 = arith.extui %120 : i1 to i32
    %c0_i32_124 = arith.constant 0 : i32
    %122 = arith.cmpi ne, %121, %c0_i32_124 : i32
    scf.if %122 {
      %c0_125 = arith.constant 0 : index
      %c0_126 = arith.constant 0 : index
      %123 = vector.load %arg10[%c0_125, %c0_126] : memref<4x1xf32, #tpu.memory_space<vmem>>, vector<4x1xf32>
      %cst_127 = arith.constant 5.120000e+02 : f32
      %124 = vector.broadcast %cst_127 : f32 to vector<4x1xf32>
      %125 = arith.divf %123, %124 : vector<4x1xf32>
      %c0_128 = arith.constant 0 : index
      %c0_129 = arith.constant 0 : index
      %126 = vector.load %arg11[%c0_128, %c0_129] : memref<4x1xf32, #tpu.memory_space<vmem>>, vector<4x1xf32>
      %cst_130 = arith.constant 5.120000e+02 : f32
      %127 = vector.broadcast %cst_130 : f32 to vector<4x1xf32>
      %128 = arith.divf %126, %127 : vector<4x1xf32>
      %129 = arith.mulf %125, %125 : vector<4x1xf32>
      %130 = arith.subf %128, %129 : vector<4x1xf32>
      %cst_131 = arith.constant 9.99999974E-6 : f32
      %131 = vector.broadcast %cst_131 : f32 to vector<4x1xf32>
      %132 = arith.addf %130, %131 : vector<4x1xf32>
      %133 = math.rsqrt %132 : vector<4x1xf32>
      %c0_132 = arith.constant 0 : index
      %c0_133 = arith.constant 0 : index
      %134 = vector.load %arg3[%c0_132, %c0_133] : memref<4x1xf32, #tpu.memory_space<vmem>>, vector<4x1xf32>
      %135 = arith.mulf %134, %133 : vector<4x1xf32>
      %c0_134 = arith.constant 0 : index
      %c0_135 = arith.constant 0 : index
      %136 = vector.load %arg4[%c0_134, %c0_135] : memref<4x1xf32, #tpu.memory_space<vmem>>, vector<4x1xf32>
      %137 = arith.mulf %125, %135 : vector<4x1xf32>
      %138 = arith.subf %136, %137 : vector<4x1xf32>
      %c0_136 = arith.constant 0 : index
      %c0_137 = arith.constant 0 : index
      %c0_138 = arith.constant 0 : index
      %139 = vector.load %arg9[%c0_136, %c0_137, %c0_138] : memref<2x4x256xf32, #tpu.memory_space<vmem>>, vector<1x4x256xf32>
      %140 = vector.shape_cast %139 : vector<1x4x256xf32> to vector<4x256xf32>
      %141 = vector.broadcast %135 : vector<4x1xf32> to vector<4x256xf32>
      %142 = arith.mulf %140, %141 : vector<4x256xf32>
      %143 = vector.broadcast %138 : vector<4x1xf32> to vector<4x256xf32>
      %144 = arith.addf %142, %143 : vector<4x256xf32>
      %c0_139 = arith.constant 0 : index
      %c0_140 = arith.constant 0 : index
      %c0_141 = arith.constant 0 : index
      %145 = vector.load %arg5[%c0_139, %c0_140, %c0_141] : memref<2x8x256xf32, #tpu.memory_space<vmem>>, vector<1x4x256xf32>
      %146 = vector.shape_cast %145 : vector<1x4x256xf32> to vector<4x256xf32>
      %147 = vector.shape_cast %144 : vector<4x256xf32> to vector<1x4x256xf32>
      tpu.vector_store %arg5[%c0_139, %c0_140, %c0_141], %147 {strides = array<i32>} : memref<2x8x256xf32, #tpu.memory_space<vmem>>, vector<1x4x256xf32>,
      %c0_142 = arith.constant 0 : index
      %c4_143 = arith.constant 4 : index
      %c0_144 = arith.constant 0 : index
      %148 = vector.load %arg5[%c0_142, %c4_143, %c0_144] : memref<2x8x256xf32, #tpu.memory_space<vmem>>, vector<1x4x256xf32>
      %149 = vector.shape_cast %148 : vector<1x4x256xf32> to vector<4x256xf32>
      %150 = vector.shape_cast %144 : vector<4x256xf32> to vector<1x4x256xf32>
      tpu.vector_store %arg5[%c0_142, %c4_143, %c0_144], %150 {strides = array<i32>} : memref<2x8x256xf32, #tpu.memory_space<vmem>>, vector<1x4x256xf32>,
      %c1_145 = arith.constant 1 : index
      %c0_146 = arith.constant 0 : index
      %c0_147 = arith.constant 0 : index
      %151 = vector.load %arg9[%c1_145, %c0_146, %c0_147] : memref<2x4x256xf32, #tpu.memory_space<vmem>>, vector<1x4x256xf32>
      %152 = vector.shape_cast %151 : vector<1x4x256xf32> to vector<4x256xf32>
      %153 = vector.broadcast %135 : vector<4x1xf32> to vector<4x256xf32>
      %154 = arith.mulf %152, %153 : vector<4x256xf32>
      %155 = vector.broadcast %138 : vector<4x1xf32> to vector<4x256xf32>
      %156 = arith.addf %154, %155 : vector<4x256xf32>
      %c1_148 = arith.constant 1 : index
      %c0_149 = arith.constant 0 : index
      %c0_150 = arith.constant 0 : index
      %157 = vector.load %arg5[%c1_148, %c0_149, %c0_150] : memref<2x8x256xf32, #tpu.memory_space<vmem>>, vector<1x4x256xf32>
      %158 = vector.shape_cast %157 : vector<1x4x256xf32> to vector<4x256xf32>
      %159 = vector.shape_cast %156 : vector<4x256xf32> to vector<1x4x256xf32>
      tpu.vector_store %arg5[%c1_148, %c0_149, %c0_150], %159 {strides = array<i32>} : memref<2x8x256xf32, #tpu.memory_space<vmem>>, vector<1x4x256xf32>,
      %c1_151 = arith.constant 1 : index
      %c4_152 = arith.constant 4 : index
      %c0_153 = arith.constant 0 : index
      %160 = vector.load %arg5[%c1_151, %c4_152, %c0_153] : memref<2x8x256xf32, #tpu.memory_space<vmem>>, vector<1x4x256xf32>
      %161 = vector.shape_cast %160 : vector<1x4x256xf32> to vector<4x256xf32>
      %162 = vector.shape_cast %156 : vector<4x256xf32> to vector<1x4x256xf32>
      tpu.vector_store %arg5[%c1_151, %c4_152, %c0_153], %162 {strides = array<i32>} : memref<2x8x256xf32, #tpu.memory_space<vmem>>, vector<1x4x256xf32>,
    } else {
    }
    return
  }
  func.func @transform_0(%arg0: i32) -> (i32, i32, i32) {
    %c0_i32 = arith.constant 0 : i32
    %c0_i32_0 = arith.constant 0 : i32
    %c0_i32_1 = arith.constant 0 : i32
    return %arg0, %c0_i32, %c0_i32_0 : i32, i32, i32
  }
  func.func @transform_1(%arg0: i32) -> (i32, i32) {
    %c0_i32 = arith.constant 0 : i32
    %c0_i32_0 = arith.constant 0 : i32
    %c0_i32_1 = arith.constant 0 : i32
    return %c0_i32, %c0_i32_0 : i32, i32
  }
  func.func @transform_2(%arg0: i32) -> (i32, i32) {
    %c0_i32 = arith.constant 0 : i32
    %c0_i32_0 = arith.constant 0 : i32
    %c0_i32_1 = arith.constant 0 : i32
    return %c0_i32, %c0_i32_0 : i32, i32
  }
  func.func @transform_3(%arg0: i32) -> (i32, i32) {
    %c0_i32 = arith.constant 0 : i32
    %c0_i32_0 = arith.constant 0 : i32
    %c0_i32_1 = arith.constant 0 : i32
    return %c0_i32, %c0_i32_0 : i32, i32
  }
  func.func @transform_4(%arg0: i32) -> (i32, i32, i32) {
    %c0_i32 = arith.constant 0 : i32
    %c0_i32_0 = arith.constant 0 : i32
    %c0_i32_1 = arith.constant 0 : i32
    %c0_i32_2 = arith.constant 0 : i32
    return %c0_i32, %c0_i32_0, %c0_i32_1 : i32, i32, i32
  }
}

</mosaic_0001>

<llo_original>
// kernel: tpu_custom_call.1
$region0: #{tpu_custom_call.1}
  #allocation0 [shape = 'u32[]', space=smem, size = 0x4, offset = 0x4, fixed_abs, tag = 'smem constant byte address 0x4 - core index']
  #allocation1 [shape = 'u32[144,128]{1,0:T(1,128)}', space=vmem, size = 0x12000, scoped, tag = 'internal scratch']
  #allocation2 [shape = 'f32[4,324]{1,0:T(4,128)}', space=vmem, size = 0x1800, scoped, tag = 'scratch operand']
  #allocation3 [shape = 'f32[36,286]{1,0:T(8,128)}', space=vmem, size = 0xf000, scoped, tag = 'scratch operand']
  #allocation4 [shape = 'f32[4,256]{1,0:T(4,128)}', space=vmem, size = 0x1000, scoped, tag = 'scratch operand']
  #allocation5 [shape = 'f32[2,4,256]{2,1,0:T(4,128)}', space=vmem, size = 0x2000, scoped, tag = 'scratch operand']
  #allocation6 [shape = 'f32[4,1]{1,0:T(4,128)}', space=vmem, size = 0x800, scoped, tag = 'scratch operand']
  #allocation7 [shape = 'f32[4,1]{1,0:T(4,128)}', space=vmem, size = 0x800, scoped, tag = 'scratch operand']
  %s0 = inlined_call_operand.hbm [shape: f32[2,4,256], index: 0, kind: input, shape index: {}]
  %s1 = inlined_call_operand.vmem [shape: f32[4,36], index: 1, kind: input, shape index: {}]
  %s2 = inlined_call_operand.vmem [shape: f32[4,1], index: 2, kind: input, shape index: {}]
  %s3 = inlined_call_operand.vmem [shape: f32[4,1], index: 3, kind: input, shape index: {}]
  %s4 = inlined_call_operand.hbm [shape: f32[2,8,256], index: 4, kind: output, shape index: {}]
  %s5 = sld [smem:[#allocation0]]
  $region61: #{tpu_custom_call.1} parent=0
    _
  %s7 = ssub.s32 1, %s5
  %s8 = scalar_select 0, %s7, %s5
  $region1: #{tpu_custom_call.1} parent=0
    #allocation8 [shape = 'u8[8192]{0}', space=vmem, size = 0x2000, scoped, tag = 'input window, operand 0']
    #allocation9 [shape = 's32[2]{0}', space=sflag, size = 0x8, scoped, tag = 'scoped memory for tpu_custom_call.1']
    #allocation10 [shape = 's32[2]{0}', space=sflag, size = 0x8, scoped, tag = 'scoped memory for tpu_custom_call.1']
    #allocation11 [shape = 'u8[16384]{0}', space=vmem, size = 0x4000, scoped, tag = 'output window, operand 0, single buffered']
    %9 = vsyncpa [#allocation9], 0
    %s10 = scalar_lea.sflag [#allocation9], 1
    %11 = vsyncpa %s10, 0
    %12 = vsyncpa [#allocation10], 0
    loop: start=0, step=1, limit=4
    $region2: #{tpu_custom_call.1} parent=1 // loop_pre_header
      _
    $region3: #{tpu_custom_call.1} parent=1 // loop_header
      %s14 = sphi 0, %s18
      %p15 = scmp.ge.s32.totalorder %s14, 4
      %s24 = sphi 0, %s26
      %s27 = sphi 0, %s24
      %s28 = sphi 0, %s27
      %s44 = sphi 0, %s28
      %s48 = sphi 0, %s48
      %s50 = sphi 0, %s48
      %s51 = sphi 0, %s50
      %s65 = sphi 0, %s51
      %s69 = sphi 0, %s69
      %s71 = sphi 0, %s69
      %s72 = sphi 0, %s71
      %s86 = sphi 0, %s72
      %s90 = sphi 0, %s90
      %s92 = sphi 0, %s90
      %s93 = sphi 0, %s92
      %s107 = sphi 0, %s93
      %s111 = sphi 0, %s111
      %s113 = sphi 0, %s111
      %s114 = sphi 0, %s113
      %s128 = sphi 0, %s114
    $region4: #{tpu_custom_call.1} parent=1 // loop_header_branch
      %17 = sbr.rel (%p15) target = $region8
    $region5: #{tpu_custom_call.1} parent=1 // loop_body
      %s19 = ssub.s32 %s14, 1
      %s20 = ssub.s32 %s14, 2
      %s21 = sadd.s32 %s14, 1
      %s22 = ssub.s32 %s14, %s21
      %p23 = scmp.eq.s32.totalorder %s22, 0
      %s25 = sadd.s32 %s24, 1
      %s26 = scalar_select %p23, %s24, %s25
      %p29 = pneg %p23
      %p30 = scmp.eq.s32.totalorder %s14, 1
      %p31 = por %p29, %p30
      %p32 = scmp.ne.s32.totalorder %s24, %s27
      %p33 = scmp.eq.s32.totalorder %s14, 0
      %p34 = por %p32, %p33
      %p35 = scmp.ne.s32.totalorder %s24, %s27
      %p36 = scmp.eq.s32.totalorder %s19, 1
      %p37 = por %p35, %p36
      %p38 = scmp.ne.s32.totalorder %s27, %s28
      %p39 = scmp.eq.s32.totalorder %s19, 0
      %p40 = por %p38, %p39
      %p41 = scmp.ne.s32.totalorder %s27, %s28
      %p42 = scmp.eq.s32.totalorder %s20, 1
      %p43 = por %p41, %p42
      %p45 = scmp.ne.s32.totalorder %s28, %s44
      %p46 = scmp.eq.s32.totalorder %s20, 0
      %p47 = por %p45, %p46
      %s49 = sadd.s32 %s48, 1
      %p52 = scmp.eq.s32.totalorder %s14, 1
      %p53 = scmp.ne.s32.totalorder %s48, %s50
      %p54 = scmp.eq.s32.totalorder %s14, 0
      %p55 = por %p53, %p54
      %p56 = scmp.ne.s32.totalorder %s48, %s50
      %p57 = scmp.eq.s32.totalorder %s19, 1
      %p58 = por %p56, %p57
      %p59 = scmp.ne.s32.totalorder %s50, %s51
      %p60 = scmp.eq.s32.totalorder %s19, 0
      %p61 = por %p59, %p60
      %p62 = scmp.ne.s32.totalorder %s50, %s51
      %p63 = scmp.eq.s32.totalorder %s20, 1
      %p64 = por %p62, %p63
      %p66 = scmp.ne.s32.totalorder %s51, %s65
      %p67 = scmp.eq.s32.totalorder %s20, 0
      %p68 = por %p66, %p67
      %s70 = sadd.s32 %s69, 1
      %p73 = scmp.eq.s32.totalorder %s14, 1
      %p74 = scmp.ne.s32.totalorder %s69, %s71
      %p75 = scmp.eq.s32.totalorder %s14, 0
      %p76 = por %p74, %p75
      %p77 = scmp.ne.s32.totalorder %s69, %s71
      %p78 = scmp.eq.s32.totalorder %s19, 1
      %p79 = por %p77, %p78
      %p80 = scmp.ne.s32.totalorder %s71, %s72
      %p81 = scmp.eq.s32.totalorder %s19, 0
      %p82 = por %p80, %p81
      %p83 = scmp.ne.s32.totalorder %s71, %s72
      %p84 = scmp.eq.s32.totalorder %s20, 1
      %p85 = por %p83, %p84
      %p87 = scmp.ne.s32.totalorder %s72, %s86
      %p88 = scmp.eq.s32.totalorder %s20, 0
      %p89 = por %p87, %p88
      %s91 = sadd.s32 %s90, 1
      %p94 = scmp.eq.s32.totalorder %s14, 1
      %p95 = scmp.ne.s32.totalorder %s90, %s92
      %p96 = scmp.eq.s32.totalorder %s14, 0
      %p97 = por %p95, %p96
      %p98 = scmp.ne.s32.totalorder %s90, %s92
      %p99 = scmp.eq.s32.totalorder %s19, 1
      %p100 = por %p98, %p99
      %p101 = scmp.ne.s32.totalorder %s92, %s93
      %p102 = scmp.eq.s32.totalorder %s19, 0
      %p103 = por %p101, %p102
      %p104 = scmp.ne.s32.totalorder %s92, %s93
      %p105 = scmp.eq.s32.totalorder %s20, 1
      %p106 = por %p104, %p105
      %p108 = scmp.ne.s32.totalorder %s93, %s107
      %p109 = scmp.eq.s32.totalorder %s20, 0
      %p110 = por %p108, %p109
      %s112 = sadd.s32 %s111, 1
      %p115 = scmp.eq.s32.totalorder %s14, 1
      %p116 = scmp.ne.s32.totalorder %s111, %s113
      %p117 = scmp.eq.s32.totalorder %s14, 0
      %p118 = por %p116, %p117
      %p119 = scmp.ne.s32.totalorder %s111, %s113
      %p120 = scmp.eq.s32.totalorder %s19, 1
      %p121 = por %p119, %p120
      %p122 = scmp.ne.s32.totalorder %s113, %s114
      %p123 = scmp.eq.s32.totalorder %s19, 0
      %p124 = por %p122, %p123
      %p125 = scmp.ne.s32.totalorder %s113, %s114
      %p126 = scmp.eq.s32.totalorder %s20, 1
      %p127 = por %p125, %p126
      %p129 = scmp.ne.s32.totalorder %s114, %s128
      %p130 = scmp.eq.s32.totalorder %s20, 0
      %p131 = por %p129, %p130
      %p132 = scmp.le.s32.totalorder 1, %s14
      %p133 = scmp.lt.s32.totalorder %s14, 3
      %p134 = pnand %p132, %p133
      %p135 = pneg %p134
      // Predicated region
      $region9: #{tpu_custom_call.1} parent=5 // pred_check
        _
      $region10: #{tpu_custom_call.1} parent=5 // pred_check_branch
        %137 = sbr.rel (%p134) target = $region12
      $region11: #{tpu_custom_call.1} parent=5 // pred_region
        %s138 = ssub.s32 %s14, 1
        // Predicated region
        $region13: #{tpu_custom_call.1} parent=11 // pred_check
          %p139 = pneg %p61
        $region14: #{tpu_custom_call.1} parent=11 // pred_check_branch
          %141 = sbr.rel (%p139) target = $region16
        $region15: #{tpu_custom_call.1} parent=11 // pred_region
          _
        $region16: #{tpu_custom_call.1} parent=11 // pred_fallthru
          _
        // Predicated region
        $region17: #{tpu_custom_call.1} parent=11 // pred_check
          %p142 = pneg %p82
        $region18: #{tpu_custom_call.1} parent=11 // pred_check_branch
          %144 = sbr.rel (%p142) target = $region20
        $region19: #{tpu_custom_call.1} parent=11 // pred_region
          _
        $region20: #{tpu_custom_call.1} parent=11 // pred_fallthru
          _
        // Predicated region
        $region21: #{tpu_custom_call.1} parent=11 // pred_check
          %p145 = pneg %p103
        $region22: #{tpu_custom_call.1} parent=11 // pred_check_branch
          %147 = sbr.rel (%p145) target = $region24
        $region23: #{tpu_custom_call.1} parent=11 // pred_region
          _
        $region24: #{tpu_custom_call.1} parent=11 // pred_fallthru
          _
      $region12: #{tpu_custom_call.1} parent=5 // pred_fallthru
        _
      %p148 = scmp.lt.s32.totalorder %s14, 2
      // Predicated region
      $region25: #{tpu_custom_call.1} parent=5 // pred_check
        %p149 = pneg %p148
      $region26: #{tpu_custom_call.1} parent=5 // pred_check_branch
        %151 = sbr.rel (%p149) target = $region28
      $region27: #{tpu_custom_call.1} parent=5 // pred_region
        // Predicated region
        $region29: #{tpu_custom_call.1} parent=27 // pred_check
          %p152 = pneg %p34
        $region30: #{tpu_custom_call.1} parent=27 // pred_check_branch
          %154 = sbr.rel (%p152) target = $region32
        $region31: #{tpu_custom_call.1} parent=27 // pred_region
          %s155 = sand.u32 %s24, 1
          %s156 = scalar_lea.sflag [#allocation9], %s155
          %s157 = sand.u32 %s24, 1
          %s158 = smul.addr %s157, 8
          %s159 = scalar_lea.vmem [#allocation8], %s158
          %s161 = ssub.s32 128, 128
          %162 = vsyncadd %s156, %s161
          %s163 = smul.addr %s14, 2
          %s164 = smul.addr %s163, 64
          %s165 = scalar_lea.hbm %s0, %s164
          %s167 = sshll.u32 %s159, 4
          %s168 = int_to_ptr.vmem [resolvable:$true] %s167
          %170 = dma.hbm_to_vmem [thread:$0]  %s165, 128, %s168, %s156
        $region32: #{tpu_custom_call.1} parent=27 // pred_fallthru
          _
      $region28: #{tpu_custom_call.1} parent=5 // pred_fallthru
        _
      %p171 = scmp.le.s32.totalorder 1, %s14
      %p172 = scmp.lt.s32.totalorder %s14, 3
      %p173 = pnand %p171, %p172
      %p174 = pneg %p173
      // Predicated region
      $region33: #{tpu_custom_call.1} parent=5 // pred_check
        _
      $region34: #{tpu_custom_call.1} parent=5 // pred_check_branch
        %176 = sbr.rel (%p173) target = $region36
      $region35: #{tpu_custom_call.1} parent=5 // pred_region
        %s177 = ssub.s32 %s14, 1
        %s178 = sand.u32 %s27, 1
        %s179 = scalar_lea.sflag [#allocation9], %s178
        %s180 = sand.u32 %s27, 1
        %s181 = smul.addr %s180, 8
        %s182 = scalar_lea.vmem [#allocation8], %s181
        // Predicated region
        $region37: #{tpu_custom_call.1} parent=35 // pred_check
          %p183 = pneg %p40
        $region38: #{tpu_custom_call.1} parent=35 // pred_check_branch
          %185 = sbr.rel (%p183) target = $region40
        $region39: #{tpu_custom_call.1} parent=35 // pred_region
          %186 = dma.done %s179, 128
        $region40: #{tpu_custom_call.1} parent=35 // pred_fallthru
          _
        %s187 = sand.u32 %s27, 1
        %s188 = scalar_lea.sflag [#allocation9], %s187
        %s189 = sand.u32 %s27, 1
        %s190 = smul.addr %s189, 8
        %s191 = scalar_lea.vmem [#allocation8], %s190
        %p192 = pneg %p40
        %p193 = pneg %p37
        %p194 = pneg %p61
        %p195 = pneg %p58
        %p196 = pneg %p82
        %p197 = pneg %p79
        %p198 = pneg %p103
        %p199 = pneg %p100
        %p200 = pneg %p124
        %p201 = pneg %p121
        %p202 = scmp.eq.s32.totalorder %s19, 0
        // Predicated region
        $region41: #{tpu_custom_call.1} parent=35 // pred_check
          %p203 = pneg %p202
        $region42: #{tpu_custom_call.1} parent=35 // pred_check_branch
          %205 = sbr.rel (%p203) target = $region44
        $region43: #{tpu_custom_call.1} parent=35 // pred_region
          %206 = vst [vmem:[#allocation2] sm:$0xff] 0.0
          %vm207 = vcmask 551936
          %208 = vst.msk [vmem:[#allocation2 + $0x8] sm:$0xf] %vm207, 0.0
          %vm209 = vcmask 3072
          %210 = vst.msk [vmem:[#allocation6] sm:$0xf] %vm209, 0.0
          %211 = vst.msk [vmem:[#allocation7] sm:$0xf] %vm209, 0.0
        $region44: #{tpu_custom_call.1} parent=35 // pred_fallthru
          _
        %v212 = vld [vmem:[%s182] sm:$0xf]
        %214 = vrot.lane.b32.xlu0 %v212, 19
        %v215 = vpop.permute.xlu0 %214
        %vm217 = vcmask 281752
        %218 = vst.msk [vmem:[#allocation2] sm:$0xf] %vm217, %v215
        %v219 = vld [vmem:[%s182] sm:$0xf]
        %221 = vrot.lane.b32.xlu0 %v219, 21
        %v222 = vpop.permute.xlu0 %221
        %vm224 = vcmask 429352
        %225 = vst.msk [vmem:[#allocation2] sm:$0xf] %vm224, %v222
        %v226 = vld [vmem:[%s182] sm:$0xf]
        %228 = vrot.lane.b32.xlu0 %v226, 23
        %v229 = vpop.permute.xlu0 %228
        %vm231 = vcmask 576952
        %232 = vst.msk [vmem:[#allocation2] sm:$0xf] %vm231, %v229
        %v233 = vld [vmem:[%s182] sm:$0xf]
        %235 = vrot.lane.b32.xlu0 %v233, 25
        %v236 = vpop.permute.xlu0 %235
        %vm238 = vcmask 724552
        %239 = vst.msk [vmem:[#allocation2] sm:$0xf] %vm238, %v236
        %v240 = vld [vmem:[%s182] sm:$0xf]
        %242 = vrot.lane.b32.xlu0 %v240, 27
        %v243 = vpop.permute.xlu0 %242
        %vm245 = vcmask 872152
        %246 = vst.msk [vmem:[#allocation2] sm:$0xf] %vm245, %v243
        %v247 = vld [vmem:[%s182] sm:$0xf]
        %249 = vrot.lane.b32.xlu0 %v247, 29
        %v250 = vpop.permute.xlu0 %249
        %vm252 = vcmask 1019752
        %253 = vst.msk [vmem:[#allocation2] sm:$0xf] %vm252, %v250
        %v254 = vld [vmem:[%s182] sm:$0xf]
        %256 = vrot.lane.b32.xlu0 %v254, 31
        %v257 = vpop.permute.xlu0 %256
        %v258 = vrot.slane %v257, 4
        %vm259 = vcmask 252928
        %v260 = vsel %vm259, %v258, %v257
        %vm262 = vcmask 1044472
        %vm263 = vcmask 121860
        %vm264 = vmor %vm263, %vm262
        %265 = vst.msk [vmem:[#allocation2] sm:$0xff] %vm264, %v260
        %v266 = vld [vmem:[%s182] sm:$0xf]
        %268 = vrot.lane.b32.xlu0 %v266, 33
        %v269 = vpop.permute.xlu0 %268
        %vm271 = vcmask 265352
        %272 = vst.msk [vmem:[#allocation2 + $0x4] sm:$0xf] %vm271, %v269
        %v273 = vld [vmem:[%s182 + $0x4] sm:$0xf]
        %275 = vrot.lane.b32.xlu0 %v273, 35
        %v276 = vpop.permute.xlu0 %275
        %vm278 = vcmask 412952
        %279 = vst.msk [vmem:[#allocation2 + $0x4] sm:$0xf] %vm278, %v276
        %v280 = vld [vmem:[%s182 + $0x4] sm:$0xf]
        %282 = vrot.lane.b32.xlu0 %v280, 37
        %v283 = vpop.permute.xlu0 %282
        %vm285 = vcmask 560552
        %286 = vst.msk [vmem:[#allocation2 + $0x4] sm:$0xf] %vm285, %v283
        %v287 = vld [vmem:[%s182 + $0x4] sm:$0xf]
        %289 = vrot.lane.b32.xlu0 %v287, 39
        %v290 = vpop.permute.xlu0 %289
        %vm292 = vcmask 708152
        %293 = vst.msk [vmem:[#allocation2 + $0x4] sm:$0xf] %vm292, %v290
        %v294 = vld [vmem:[%s182 + $0x4] sm:$0xf]
        %296 = vrot.lane.b32.xlu0 %v294, 41
        %v297 = vpop.permute.xlu0 %296
        %vm299 = vcmask 855752
        %300 = vst.msk [vmem:[#allocation2 + $0x4] sm:$0xf] %vm299, %v297
        %v301 = vld [vmem:[%s182 + $0x4] sm:$0xf]
        %303 = vrot.lane.b32.xlu0 %v301, 43
        %v304 = vpop.permute.xlu0 %303
        %vm306 = vcmask 1003352
        %307 = vst.msk [vmem:[#allocation2 + $0x4] sm:$0xf] %vm306, %v304
        %v308 = vld [vmem:[%s182 + $0x4] sm:$0xf]
        %310 = vrot.lane.b32.xlu0 %v308, 45
        %v311 = vpop.permute.xlu0 %310
        %v312 = vrot.slane %v311, 4
        %vm313 = vcmask 367616
        %v314 = vsel %vm313, %v312, %v311
        %vm316 = vcmask 1044456
        %vm317 = vcmask 105476
        %vm318 = vmor %vm317, %vm316
        %319 = vst.msk [vmem:[#allocation2 + $0x4] sm:$0xff] %vm318, %v314
        %v320 = vld [vmem:[%s182 + $0x4] sm:$0xf]
        %322 = vrot.lane.b32.xlu0 %v320, 47
        %v323 = vpop.permute.xlu0 %322
        %vm325 = vcmask 248952
        %326 = vst.msk [vmem:[#allocation2 + $0x8] sm:$0xf] %vm325, %v323
        %v327 = vld [vmem:[%s182 + $0x4] sm:$0xf]
        %329 = vrot.lane.b32.xlu0 %v327, 49
        %v330 = vpop.permute.xlu0 %329
        %vm332 = vcmask 396552
        %333 = vst.msk [vmem:[#allocation2 + $0x8] sm:$0xf] %vm332, %v330
        %v334 = vld [vmem:[#allocation2] sm:$0xff]
        %v335 = vld [vmem:[#allocation2 + $0x8] sm:$0xf]
        %v337 = vcombine.high %v334, %v334
        %339 = vst [vmem:[#allocation3] sm:$0xf] %v334
        %340 = vst [vmem:[#allocation3 + $0x8] sm:$0xf] %v337
        %vm341 = vcmask 240640
        %342 = vst.msk [vmem:[#allocation3 + $0x10] sm:$0xf] %vm341, %v335
        %v343 = vld [vmem:[#allocation2] sm:$0xff]
        %v344 = vld [vmem:[#allocation2 + $0x8] sm:$0xf]
        %v347 = vcombine.low %v343, %v343
        %v348 = vcombine.low %v344, %v344
        %349 = vrot.lane.b32.xlu0 %v347, 127
        %v350 = vpop.permute.xlu0 %349
        %351 = vrot.lane.b32.xlu0 %v343, 127
        %v352 = vpop.permute.xlu0 %351
        %353 = vrot.lane.b32.xlu0 %v348, 127
        %v354 = vpop.permute.xlu0 %353
        %vm355 = vcmask 1039360
        %v356 = vsel %vm355, %v350, %v352
        %v357 = vsel %vm355, %v352, %v354
        %361 = vst [vmem:[#allocation3] sm:$0xf0] %v356
        %362 = vst [vmem:[#allocation3 + $0x8] sm:$0xf0] %v357
        %vm363 = vcmask 244740
        %364 = vst.msk [vmem:[#allocation3 + $0x10] sm:$0xf0] %vm363, %v354
        %v365 = vld [vmem:[#allocation2] sm:$0xff]
        %v366 = vld [vmem:[#allocation2 + $0x8] sm:$0xf]
        %v369 = vcombine.high %v365, %v365
        %370 = vrot.lane.b32.xlu0 %v365, 126
        %v371 = vpop.permute.xlu0 %370
        %372 = vrot.lane.b32.xlu0 %v369, 126
        %v373 = vpop.permute.xlu0 %372
        %374 = vrot.lane.b32.xlu0 %v366, 126
        %v375 = vpop.permute.xlu0 %374
        %vm376 = vcmask 1031168
        %v377 = vsel %vm376, %v371, %v373
        %v378 = vsel %vm376, %v373, %v375
        %382 = vst [vmem:[#allocation3 + $0x18] sm:$0xf] %v377
        %383 = vst [vmem:[#allocation3 + $0x20] sm:$0xf] %v378
        %384 = vst.msk [vmem:[#allocation3 + $0x28] sm:$0xf] %vm341, %v375
        %v385 = vld [vmem:[#allocation2] sm:$0xff]
        %v386 = vld [vmem:[#allocation2 + $0x8] sm:$0xf]
        %v389 = vcombine.low %v385, %v385
        %v390 = vcombine.low %v386, %v386
        %391 = vrot.lane.b32.xlu0 %v389, 110
        %v392 = vpop.permute.xlu0 %391
        %393 = vrot.lane.b32.xlu0 %v385, 110
        %v394 = vpop.permute.xlu0 %393
        %395 = vrot.lane.b32.xlu0 %v390, 110
        %v396 = vpop.permute.xlu0 %395
        %vm397 = vcmask 900096
        %v398 = vsel %vm397, %v392, %v394
        %v399 = vsel %vm397, %v394, %v396
        %403 = vst [vmem:[#allocation3 + $0x18] sm:$0xf0] %v398
        %404 = vst [vmem:[#allocation3 + $0x20] sm:$0xf0] %v399
        %405 = vst.msk [vmem:[#allocation3 + $0x28] sm:$0xf0] %vm363, %v396
        %v406 = vld [vmem:[#allocation2] sm:$0xff]
        %v407 = vld [vmem:[#allocation2 + $0x8] sm:$0xf]
        %v410 = vcombine.high %v406, %v406
        %411 = vrot.lane.b32.xlu0 %v406, 109
        %v412 = vpop.permute.xlu0 %411
        %413 = vrot.lane.b32.xlu0 %v410, 109
        %v414 = vpop.permute.xlu0 %413
        %415 = vrot.lane.b32.xlu0 %v407, 109
        %v416 = vpop.permute.xlu0 %415
        %vm417 = vcmask 891904
        %v418 = vsel %vm417, %v412, %v414
        %v419 = vsel %vm417, %v414, %v416
        %423 = vst [vmem:[#allocation3 + $0x30] sm:$0xf] %v418
        %424 = vst [vmem:[#allocation3 + $0x38] sm:$0xf] %v419
        %425 = vst.msk [vmem:[#allocation3 + $0x40] sm:$0xf] %vm341, %v416
        %v426 = vld [vmem:[#allocation2] sm:$0xff]
        %v427 = vld [vmem:[#allocation2 + $0x8] sm:$0xf]
        %v430 = vcombine.low %v426, %v426
        %v431 = vcombine.low %v427, %v427
        %432 = vrot.lane.b32.xlu0 %v430, 108
        %v433 = vpop.permute.xlu0 %432
        %434 = vrot.lane.b32.xlu0 %v426, 108
        %v435 = vpop.permute.xlu0 %434
        %436 = vrot.lane.b32.xlu0 %v431, 108
        %v437 = vpop.permute.xlu0 %436
        %vm438 = vcmask 883712
        %v439 = vsel %vm438, %v433, %v435
        %v440 = vsel %vm438, %v435, %v437
        %444 = vst [vmem:[#allocation3 + $0x30] sm:$0xf0] %v439
        %445 = vst [vmem:[#allocation3 + $0x38] sm:$0xf0] %v440
        %446 = vst.msk [vmem:[#allocation3 + $0x40] sm:$0xf0] %vm363, %v437
        %v447 = vld [vmem:[#allocation2] sm:$0xff]
        %v448 = vld [vmem:[#allocation2 + $0x8] sm:$0xf]
        %v451 = vcombine.high %v447, %v447
        %452 = vrot.lane.b32.xlu0 %v447, 92
        %v453 = vpop.permute.xlu0 %452
        %454 = vrot.lane.b32.xlu0 %v451, 92
        %v455 = vpop.permute.xlu0 %454
        %456 = vrot.lane.b32.xlu0 %v448, 92
        %v457 = vpop.permute.xlu0 %456
        %vm458 = vcmask 752640
        %v459 = vsel %vm458, %v453, %v455
        %v460 = vsel %vm458, %v455, %v457
        %464 = vst [vmem:[#allocation3 + $0x48] sm:$0xf] %v459
        %465 = vst [vmem:[#allocation3 + $0x50] sm:$0xf] %v460
        %466 = vst.msk [vmem:[#allocation3 + $0x58] sm:$0xf] %vm341, %v457
        %v467 = vld [vmem:[#allocation2] sm:$0xff]
        %v468 = vld [vmem:[#allocation2 + $0x8] sm:$0xf]
        %v471 = vcombine.low %v467, %v467
        %v472 = vcombine.low %v468, %v468
        %473 = vrot.lane.b32.xlu0 %v471, 91
        %v474 = vpop.permute.xlu0 %473
        %475 = vrot.lane.b32.xlu0 %v467, 91
        %v476 = vpop.permute.xlu0 %475
        %477 = vrot.lane.b32.xlu0 %v472, 91
        %v478 = vpop.permute.xlu0 %477
        %vm479 = vcmask 744448
        %v480 = vsel %vm479, %v474, %v476
        %v481 = vsel %vm479, %v476, %v478
        %485 = vst [vmem:[#allocation3 + $0x48] sm:$0xf0] %v480
        %486 = vst [vmem:[#allocation3 + $0x50] sm:$0xf0] %v481
        %487 = vst.msk [vmem:[#allocation3 + $0x58] sm:$0xf0] %vm363, %v478
        %v488 = vld [vmem:[#allocation2] sm:$0xff]
        %v489 = vld [vmem:[#allocation2 + $0x8] sm:$0xf]
        %v492 = vcombine.high %v488, %v488
        %493 = vrot.lane.b32.xlu0 %v488, 90
        %v494 = vpop.permute.xlu0 %493
        %495 = vrot.lane.b32.xlu0 %v492, 90
        %v496 = vpop.permute.xlu0 %495
        %497 = vrot.lane.b32.xlu0 %v489, 90
        %v498 = vpop.permute.xlu0 %497
        %vm499 = vcmask 736256
        %v500 = vsel %vm499, %v494, %v496
        %v501 = vsel %vm499, %v496, %v498
        %505 = vst [vmem:[#allocation3 + $0x60] sm:$0xf] %v500
        %506 = vst [vmem:[#allocation3 + $0x68] sm:$0xf] %v501
        %507 = vst.msk [vmem:[#allocation3 + $0x70] sm:$0xf] %vm341, %v498
        %v508 = vld [vmem:[%s1] sm:$0xf]
        %v509 = vld [vmem:[#allocation3] sm:$0xff]
        %v510 = vld [vmem:[#allocation3 + $0x8] sm:$0xff]
        %v511 = vld [vmem:[#allocation3 + $0x10] sm:$0xff]
        %v512 = vld [vmem:[#allocation3 + $0x18] sm:$0xff]
        %v513 = vld [vmem:[#allocation3 + $0x20] sm:$0xff]
        %v514 = vld [vmem:[#allocation3 + $0x28] sm:$0xff]
        %v515 = vld [vmem:[#allocation3 + $0x30] sm:$0xff]
        %v516 = vld [vmem:[#allocation3 + $0x38] sm:$0xff]
        %v517 = vld [vmem:[#allocation3 + $0x40] sm:$0xff]
        %v518 = vld [vmem:[#allocation3 + $0x48] sm:$0xff]
        %v519 = vld [vmem:[#allocation3 + $0x50] sm:$0xff]
        %v520 = vld [vmem:[#allocation3 + $0x58] sm:$0xff]
        %v521 = vld [vmem:[#allocation3 + $0x60] sm:$0xf]
        %v522 = vld [vmem:[#allocation3 + $0x68] sm:$0xf]
        %v523 = vld [vmem:[#allocation3 + $0x70] sm:$0xf]
        %vm524 = vcmask 293888
        %v526 = vsel %vm524, %v508, 0
        %vm528 = vcmask 1043456
        %v530 = vsel %vm528, %v521, 0
        %v533 = vsel %vm528, %v522, 0
        %v536 = vsel %vm528, %v523, 0
        %538 = vmatprep.subr.mxu0 0.0
        %539 = vmatpush1.msra.mxu0 0.0
        %540 = vmatprep.subr.mxu0 0.0
        %541 = vmatpush1.msra.mxu0 0.0
        %542 = vmatprep.subr.mxu0 0.0
        %543 = vmatpush1.msra.mxu0 0.0
        %544 = vmatprep.subr.mxu0 0.0
        %545 = vmatpush1.msra.mxu0 0.0
        %546 = vmatprep.subr.mxu0 0.0
        %547 = vmatpush1.msra.mxu0 0.0
        %548 = vmatprep.subr.mxu0 0.0
        %549 = vmatpush1.msra.mxu0 0.0
        %550 = vmatprep.subr.mxu0 0.0
        %551 = vmatpush1.msra.mxu0 0.0
        %552 = vmatprep.subr.mxu0 0.0
        %553 = vmatpush1.msra.mxu0 0.0
        %554 = vmatprep.subr.mxu0 0.0
        %555 = vmatpush1.msra.mxu0 0.0
        %556 = vmatprep.subr.mxu0 0.0
        %557 = vmatpush1.msra.mxu0 0.0
        %558 = vmatprep.subr.mxu0 0.0
        %559 = vmatpush1.msra.mxu0 0.0
        %560 = vmatprep.subr.mxu0 %v533
        %561 = vmatpush1.msra.mxu0 %v530
        %562 = vmatprep.subr.mxu0 %v519
        %563 = vmatpush1.msra.mxu0 %v518
        %564 = vmatprep.subr.mxu0 %v516
        %565 = vmatpush1.msra.mxu0 %v515
        %566 = vmatprep.subr.mxu0 %v513
        %567 = vmatpush1.msra.mxu0 %v512
        %568 = vmatprep.subr.mxu0 %v510
        %569 = vmatpush1.msra.mxu0 %v509
        %570 = vmatprep.subr.mxu0 0.0
        %571 = vmatpush2.msra.mxu0 0.0
        %572 = vmatprep.subr.mxu0 0.0
        %573 = vmatpush2.msra.mxu0 0.0
        %574 = vmatprep.subr.mxu0 0.0
        %575 = vmatpush2.msra.mxu0 0.0
        %576 = vmatprep.subr.mxu0 0.0
        %577 = vmatpush2.msra.mxu0 0.0
        %578 = vmatprep.subr.mxu0 0.0
        %579 = vmatpush2.msra.mxu0 0.0
        %580 = vmatprep.subr.mxu0 0.0
        %581 = vmatpush2.msra.mxu0 0.0
        %582 = vmatprep.subr.mxu0 0.0
        %583 = vmatpush2.msra.mxu0 0.0
        %584 = vmatprep.subr.mxu0 0.0
        %585 = vmatpush2.msra.mxu0 0.0
        %586 = vmatprep.subr.mxu0 0.0
        %587 = vmatpush2.msra.mxu0 0.0
        %588 = vmatprep.subr.mxu0 0.0
        %589 = vmatpush2.msra.mxu0 0.0
        %590 = vmatprep.subr.mxu0 0.0
        %591 = vmatpush2.msra.mxu0 0.0
        %592 = vmatprep.subr.mxu0 0.0
        %593 = vmatpush2.msra.mxu0 0.0
        %594 = vmatprep.subr.mxu0 0.0
        %595 = vmatpush2.msra.mxu0 0.0
        %596 = vmatprep.subr.mxu0 0.0
        %597 = vmatpush2.msra.mxu0 0.0
        %598 = vmatprep.subr.mxu0 0.0
        %599 = vmatpush2.msra.mxu0 0.0
        %600 = vmatprep.subr.mxu0 0.0
        %601 = vmatpush2.msra.mxu0 0.0
        %602 = vmatprep.mubr.f32.mxu0 0.0
        %603 = vmatmul.mubr.f32.gmra.mxu0 %v526
        %v604 = vpop.f32.mrf.mxu0
        %v605 = vadd.f32 0.0, %v604
        %v606 = vpop.f32.mrf.mxu0
        %v607 = vadd.f32 0.0, %v606
        %608 = vdwg.mxu0
        %609 = vmatprep.subr.mxu0 0.0
        %610 = vmatpush1.msra.mxu0 0.0
        %611 = vmatprep.subr.mxu0 0.0
        %612 = vmatpush1.msra.mxu0 0.0
        %613 = vmatprep.subr.mxu0 0.0
        %614 = vmatpush1.msra.mxu0 0.0
        %615 = vmatprep.subr.mxu0 0.0
        %616 = vmatpush1.msra.mxu0 0.0
        %617 = vmatprep.subr.mxu0 0.0
        %618 = vmatpush1.msra.mxu0 0.0
        %619 = vmatprep.subr.mxu0 0.0
        %620 = vmatpush1.msra.mxu0 0.0
        %621 = vmatprep.subr.mxu0 0.0
        %622 = vmatpush1.msra.mxu0 0.0
        %623 = vmatprep.subr.mxu0 0.0
        %624 = vmatpush1.msra.mxu0 0.0
        %625 = vmatprep.subr.mxu0 0.0
        %626 = vmatpush1.msra.mxu0 0.0
        %627 = vmatprep.subr.mxu0 0.0
        %628 = vmatpush1.msra.mxu0 0.0
        %629 = vmatprep.subr.mxu0 0.0
        %630 = vmatpush1.msra.mxu0 0.0
        %631 = vmatprep.subr.mxu0 0.0
        %632 = vmatpush1.msra.mxu0 %v536
        %633 = vmatprep.subr.mxu0 0.0
        %634 = vmatpush1.msra.mxu0 %v520
        %635 = vmatprep.subr.mxu0 0.0
        %636 = vmatpush1.msra.mxu0 %v517
        %637 = vmatprep.subr.mxu0 0.0
        %638 = vmatpush1.msra.mxu0 %v514
        %639 = vmatprep.subr.mxu0 0.0
        %640 = vmatpush1.msra.mxu0 %v511
        %641 = vmatprep.subr.mxu0 0.0
        %642 = vmatpush2.msra.mxu0 0.0
        %643 = vmatprep.subr.mxu0 0.0
        %644 = vmatpush2.msra.mxu0 0.0
        %645 = vmatprep.subr.mxu0 0.0
        %646 = vmatpush2.msra.mxu0 0.0
        %647 = vmatprep.subr.mxu0 0.0
        %648 = vmatpush2.msra.mxu0 0.0
        %649 = vmatprep.subr.mxu0 0.0
        %650 = vmatpush2.msra.mxu0 0.0
        %651 = vmatprep.subr.mxu0 0.0
        %652 = vmatpush2.msra.mxu0 0.0
        %653 = vmatprep.subr.mxu0 0.0
        %654 = vmatpush2.msra.mxu0 0.0
        %655 = vmatprep.subr.mxu0 0.0
        %656 = vmatpush2.msra.mxu0 0.0
        %657 = vmatprep.subr.mxu0 0.0
        %658 = vmatpush2.msra.mxu0 0.0
        %659 = vmatprep.subr.mxu0 0.0
        %660 = vmatpush2.msra.mxu0 0.0
        %661 = vmatprep.subr.mxu0 0.0
        %662 = vmatpush2.msra.mxu0 0.0
        %663 = vmatprep.subr.mxu0 0.0
        %664 = vmatpush2.msra.mxu0 0.0
        %665 = vmatprep.subr.mxu0 0.0
        %666 = vmatpush2.msra.mxu0 0.0
        %667 = vmatprep.subr.mxu0 0.0
        %668 = vmatpush2.msra.mxu0 0.0
        %669 = vmatprep.subr.mxu0 0.0
        %670 = vmatpush2.msra.mxu0 0.0
        %671 = vmatprep.subr.mxu0 0.0
        %672 = vmatpush2.msra.mxu0 0.0
        %673 = vmatprep.mubr.f32.mxu0 0.0
        %674 = vmatmul.mubr.f32.gmra.mxu0 %v526
        %v675 = vpop.f32.mrf.mxu0
        %v676 = vadd.f32 0.0, %v675
        %v677 = vpop.f32.mrf.mxu0
        %678 = vdwg.mxu0
        %vm679 = vcmask 125952
        %680 = vst.msk [vmem:[#allocation4] sm:$0xf] %vm679, %v605
        %682 = vrot.lane.b32.xlu0 %v605, 126
        %v683 = vpop.permute.xlu0 %682
        %vm685 = vcmask 257152
        %686 = vst.msk [vmem:[#allocation4] sm:$0xf] %vm685, %v683
        %687 = vrot.lane.b32.xlu0 %v605, 124
        %v688 = vpop.permute.xlu0 %687
        %vm690 = vcmask 388352
        %691 = vst.msk [vmem:[#allocation4] sm:$0xf] %vm690, %v688
        %692 = vrot.lane.b32.xlu0 %v605, 122
        %v693 = vpop.permute.xlu0 %692
        %vm695 = vcmask 519552
        %696 = vst.msk [vmem:[#allocation4] sm:$0xf] %vm695, %v693
        %697 = vrot.lane.b32.xlu0 %v605, 120
        %v698 = vpop.permute.xlu0 %697
        %vm700 = vcmask 650752
        %701 = vst.msk [vmem:[#allocation4] sm:$0xf] %vm700, %v698
        %702 = vrot.lane.b32.xlu0 %v605, 118
        %v703 = vpop.permute.xlu0 %702
        %vm705 = vcmask 781952
        %706 = vst.msk [vmem:[#allocation4] sm:$0xf] %vm705, %v703
        %707 = vrot.lane.b32.xlu0 %v605, 116
        %v708 = vpop.permute.xlu0 %707
        %vm710 = vcmask 913152
        %711 = vst.msk [vmem:[#allocation4] sm:$0xf] %vm710, %v708
        %v713 = vcombine.low %v605, %v607
        %714 = vrot.lane.b32.xlu0 %v713, 114
        %v715 = vpop.permute.xlu0 %714
        %v716 = vrot.slane %v715, 4
        %vm717 = vcmask 932864
        %v718 = vsel %vm717, %v715, %v716
        %vm720 = vcmask 1044352
        %721 = vst.msk [vmem:[#allocation4] sm:$0xf] %vm720, %v718
        %722 = vrot.lane.b32.xlu0 %v607, 112
        %v723 = vpop.permute.xlu0 %722
        %725 = vst.msk [vmem:[#allocation4 + $0x4] sm:$0xf] %vm679, %v723
        %726 = vrot.lane.b32.xlu0 %v607, 110
        %v727 = vpop.permute.xlu0 %726
        %729 = vst.msk [vmem:[#allocation4 + $0x4] sm:$0xf] %vm685, %v727
        %730 = vrot.lane.b32.xlu0 %v607, 108
        %v731 = vpop.permute.xlu0 %730
        %733 = vst.msk [vmem:[#allocation4 + $0x4] sm:$0xf] %vm690, %v731
        %734 = vrot.lane.b32.xlu0 %v607, 106
        %v735 = vpop.permute.xlu0 %734
        %737 = vst.msk [vmem:[#allocation4 + $0x4] sm:$0xf] %vm695, %v735
        %738 = vrot.lane.b32.xlu0 %v607, 104
        %v739 = vpop.permute.xlu0 %738
        %741 = vst.msk [vmem:[#allocation4 + $0x4] sm:$0xf] %vm700, %v739
        %742 = vrot.lane.b32.xlu0 %v607, 102
        %v743 = vpop.permute.xlu0 %742
        %745 = vst.msk [vmem:[#allocation4 + $0x4] sm:$0xf] %vm705, %v743
        %v747 = vcombine.low %v607, %v676
        %748 = vrot.lane.b32.xlu0 %v747, 100
        %v749 = vpop.permute.xlu0 %748
        %v750 = vrot.slane %v749, 4
        %vm751 = vcmask 818176
        %v752 = vsel %vm751, %v749, %v750
        %754 = vst.msk [vmem:[#allocation4 + $0x4] sm:$0xf] %vm710, %v752
        %755 = vrot.lane.b32.xlu0 %v676, 98
        %v756 = vpop.permute.xlu0 %755
        %758 = vst.msk [vmem:[#allocation4 + $0x4] sm:$0xf] %vm720, %v756
        %v759 = vld [vmem:[#allocation4] sm:$0xff]
        %s760 = smul.u32 %s19, 2
        %s761 = smul.addr %s760, 4
        %s762 = scalar_lea.vmem [#allocation5], %s761
        %763 = vst [vmem:[%s762] sm:$0xff] %v759
        %v764 = vld [vmem:[#allocation6] sm:$0xf]
        %v766 = vcombine.high %v759, %v759
        %v768 = vsel %vm528, %v759, 0.0
        %v769 = vsel %vm528, %v766, 0.0
        %v770 = vadd.f32 %v768, %v769
        %771 = vadd.xlane.f32.xlu0 %v770
        %v772 = vpop.xlane.xlu0 %771
        %v773 = vadd.f32 %v764, %v772
        %vm774 = vcmask 3072
        %775 = vst.msk [vmem:[#allocation6] sm:$0xf] %vm774, %v773
        %v776 = vld [vmem:[#allocation7] sm:$0xf]
        %v777 = vmul.f32 %v759, %v759
        %v779 = vcombine.high %v777, %v777
        %v781 = vsel %vm528, %v777, 0.0
        %v782 = vsel %vm528, %v779, 0.0
        %v783 = vadd.f32 %v781, %v782
        %784 = vadd.xlane.f32.xlu0 %v783
        %v785 = vpop.xlane.xlu0 %784
        %v786 = vadd.f32 %v776, %v785
        %787 = vst.msk [vmem:[#allocation7] sm:$0xf] %vm774, %v786
        %p788 = scmp.eq.s32.totalorder %s19, 1
        // Predicated region
        $region45: #{tpu_custom_call.1} parent=35 // pred_check
          %p789 = pneg %p788
        $region46: #{tpu_custom_call.1} parent=35 // pred_check_branch
          %791 = sbr.rel (%p789) target = $region48
        $region47: #{tpu_custom_call.1} parent=35 // pred_region
          %v792 = vld [vmem:[#allocation6] sm:$0xf]
          %v793 = vrcp.pop 512.0
          %v794 = vmul.f32 %v792, %v793
          %v795 = vld [vmem:[#allocation7] sm:$0xf]
          %v796 = vmul.f32 %v795, %v793
          %v797 = vmul.f32 %v794, %v794
          %v798 = vsub.f32 %v796, %v797
          %v799 = vadd.f32 %v798, 1e-05
          %v800 = vrsqrt.pop %v799
          %v801 = vld [vmem:[%s2] sm:$0xf]
          %v802 = vmul.f32 %v801, %v800
          %v803 = vld [vmem:[%s3] sm:$0xf]
          %v804 = vmul.f32 %v794, %v802
          %v805 = vsub.f32 %v803, %v804
          %v806 = vld [vmem:[#allocation5] sm:$0xff]
          %808 = vset.pattern.permute.xlu0 0
          %809 = vperm.xlu0 %808, %v802
          %v810 = vpop.permute.xlu0 %809
          %v812 = vunpack.c.l.s4 839922192
          %v813 = vunpack.c.0.s8 %v812
          %v814 = vlaneseq
          %v815 = vshrl.u32 %v814, 7
          %v816 = vsub.s32 %v813, %v815
          %v817 = vrot.slane %v810, %v816
          %v819 = vmul.f32 %v806, %v817
          %821 = vset.pattern.permute.xlu0 0
          %822 = vperm.xlu0 %821, %v805
          %v823 = vpop.permute.xlu0 %822
          %v825 = vunpack.c.l.s4 839922192
          %v826 = vunpack.c.0.s8 %v825
          %v827 = vlaneseq
          %v828 = vshrl.u32 %v827, 7
          %v829 = vsub.s32 %v826, %v828
          %v830 = vrot.slane %v823, %v829
          %v832 = vadd.f32 %v819, %v830
          %v834 = vcombine.high %v832, %v832
          %836 = vst [vmem:[#allocation11] sm:$0xf] %v832
          %837 = vst [vmem:[#allocation11 + $0x8] sm:$0xf] %v834
          %v838 = vcombine.low %v832, %v832
          %840 = vst [vmem:[#allocation11] sm:$0xf0] %v838
          %841 = vst [vmem:[#allocation11 + $0x8] sm:$0xf0] %v832
          %s842 = scalar_lea.vmem [#allocation5], 8
          %v843 = vld [vmem:[%s842] sm:$0xff]
          %v844 = vmul.f32 %v843, %v817
          %v845 = vadd.f32 %v844, %v830
          %v847 = vcombine.high %v845, %v845
          %s849 = scalar_lea.vmem [#allocation11], 16
          %850 = vst [vmem:[%s849] sm:$0xf] %v845
          %851 = vst [vmem:[%s849 + $0x8] sm:$0xf] %v847
          %v852 = vcombine.low %v845, %v845
          %854 = vst [vmem:[%s849] sm:$0xf0] %v852
          %855 = vst [vmem:[%s849 + $0x8] sm:$0xf0] %v845
        $region48: #{tpu_custom_call.1} parent=35 // pred_fallthru
          _
        // Predicated region
        $region49: #{tpu_custom_call.1} parent=35 // pred_check
          %p856 = pneg %p121
        $region50: #{tpu_custom_call.1} parent=35 // pred_check_branch
          %858 = sbr.rel (%p856) target = $region52
        $region51: #{tpu_custom_call.1} parent=35 // pred_region
          %s860 = ssub.s32 512, 512
          %861 = vsyncadd [#allocation10], %s860
          %s862 = sshll.u32 [#allocation11], 4
          %s863 = int_to_ptr.vmem [resolvable:$true] %s862
          %868 = dma.vmem_to_hbm [thread:$0]  %s863, 512, %s4, [#allocation10], 256, 256, 16
        $region52: #{tpu_custom_call.1} parent=35 // pred_fallthru
          _
        // Predicated region
        $region53: #{tpu_custom_call.1} parent=35 // pred_check
          %p869 = pneg %p121
        $region54: #{tpu_custom_call.1} parent=35 // pred_check_branch
          %871 = sbr.rel (%p869) target = $region56
        $region55: #{tpu_custom_call.1} parent=35 // pred_region
          %872 = dma.done [#allocation10], 512
        $region56: #{tpu_custom_call.1} parent=35 // pred_fallthru
          _
      $region36: #{tpu_custom_call.1} parent=5 // pred_fallthru
        _
      %p873 = scmp.le.s32.totalorder 2, %s14
      // Predicated region
      $region57: #{tpu_custom_call.1} parent=5 // pred_check
        %p874 = pneg %p873
      $region58: #{tpu_custom_call.1} parent=5 // pred_check_branch
        %876 = sbr.rel (%p874) target = $region60
      $region59: #{tpu_custom_call.1} parent=5 // pred_region
        %s877 = ssub.s32 %s14, 2
      $region60: #{tpu_custom_call.1} parent=5 // pred_fallthru
        _
    $region6: #{tpu_custom_call.1} parent=1 // loop_footer
      %s18 = sadd.s32 1, %s14
    $region7: #{tpu_custom_call.1} parent=1 // loop_footer_branch
      %13 = sbr.rel target = $region3
    $region8: #{tpu_custom_call.1} parent=1 // loop_exit
      _
    %878 = vsyncpa [#allocation9], 1
    %s879 = scalar_lea.sflag [#allocation9], 1
    %880 = vsyncpa %s879, 1
    %881 = vsyncpa [#allocation10], 1
    %s882 = scalar_lea.sflag [#allocation10], 1
    %883 = vsyncpa %s882, 1

</llo_original>
